<compile_context>
chip_gen: v6e
topology: v6e:2x2x1
jax: 0.10.0
libtpu: 0.0.40
codegen_flags: <defaults>
</compile_context>

<pallas_src>
import functools

import jax
import jax.numpy as jnp
from jax.experimental import pallas as pl
from jax.experimental.pallas import tpu as pltpu


# ----------------------------------------------------------------------------
# Fused per-axis kernel: 1x1x1 projections + attention + residual.
#
#   x block : (1, L, F) f32, F = C*R, feature order = (channel, rest) so the
#             per-channel slabs x[:, c*R:(c+1)*R] are lane-aligned when R%128==0.
#   o block : (1, LQ, F) f32, query-row tile of the residual-updated slab.
#   weights : flat (3C*C,) f32 in SMEM (theta | phi | g), bias (3C,), beta (1,).
# ----------------------------------------------------------------------------
def _rsa_pass_kernel(w_ref, b_ref, beta_ref, x_ref, o_ref, *, C, R):
    L = x_ref.shape[1]
    LQ = o_ref.shape[1]
    q = pl.program_id(1)
    row0 = pl.multiple_of(q * LQ, LQ)

    x_all = x_ref[0]                                   # (L, F) f32, keys/values
    x_q = x_ref[0, pl.ds(row0, LQ), :]                 # (LQ, F) f32, query rows

    xs_all = [x_all[:, c * R:(c + 1) * R] for c in range(C)]   # C x (L, R)
    xs_q = [x_q[:, c * R:(c + 1) * R] for c in range(C)]       # C x (LQ, R)

    def project(xs, off):
        # 1x1x1 conv over channels as C*C scalar*slab FMAs (f32 accumulate),
        # cast to bf16 only at the very end for the MXU operands.
        cols = []
        for c in range(C):
            acc = xs[0] * w_ref[(off + c) * C + 0]
            for cp in range(1, C):
                acc = acc + xs[cp] * w_ref[(off + c) * C + cp]
            cols.append((acc + b_ref[off + c]).astype(jnp.bfloat16))
        return jnp.concatenate(cols, axis=-1)          # (rows, C*R) bf16

    t = project(xs_q, 0)          # theta : query rows only   (LQ, F)
    p = project(xs_all, C)        # phi   : all rows          (L,  F)
    g = project(xs_all, 2 * C)    # g     : all rows          (L,  F)

    # scores: one large-K contraction over the flattened feature axis.
    s = jax.lax.dot_general(t, p, (((1,), (1,)), ((), ())),
                            preferred_element_type=jnp.float32)   # (LQ, L) f32

    # f32 softmax with an EUP reciprocal (free slot).
    m = jnp.max(s, axis=-1, keepdims=True)
    e = jnp.exp(s - m)
    attn = e * pl.reciprocal(jnp.sum(e, axis=-1, keepdims=True), approx=True)

    out = jnp.dot(attn.astype(jnp.bfloat16), g,
                  preferred_element_type=jnp.float32)             # (LQ, F) f32

    o_ref[0] = x_q + beta_ref[0] * out


def _pick_num_query_tiles(L):
    """>=2 query tiles (to give megacore >=4 parallel steps with small B) while
    keeping each tile a multiple of 8 sublanes."""
    for nq in (4, 2):
        if L % nq == 0 and (L // nq) % 8 == 0:
            return nq
    return 1


def _vmem_limit_bytes():
    # Generation-aware budget: ~75% of physical VMEM, capped.  (v7x: 64 MiB
    # physical -> 48 MiB budget; v5e/v6e: 128 MiB -> 96 MiB.)
    try:
        cap = int(pltpu.get_tpu_info().vmem_capacity_bytes)
    except Exception:
        cap = 64 * 1024 * 1024
    return min((cap * 3) // 4, 100 * 1024 * 1024)


def _rsa_axis_pass(x2, wcat_flat, bcat, beta, *, C, R):
    """x2: (B, L, F=C*R) f32 -> (B, L, F) f32, one fused pallas_call."""
    B, L, F = x2.shape
    nq = _pick_num_query_tiles(L)
    LQ = L // nq
    kernel = functools.partial(_rsa_pass_kernel, C=C, R=R)
    return pl.pallas_call(
        kernel,
        out_shape=jax.ShapeDtypeStruct((B, L, F), x2.dtype),
        grid=(B, nq),
        in_specs=[
            pl.BlockSpec(memory_space=pltpu.MemorySpace.SMEM),   # wcat (3C*C,)
            pl.BlockSpec(memory_space=pltpu.MemorySpace.SMEM),   # bcat (3C,)
            pl.BlockSpec(memory_space=pltpu.MemorySpace.SMEM),   # beta (1,)
            # Full per-batch key/value slab; block index is constant across the
            # query-tile axis so Pallas does not re-DMA it per query step.
            pl.BlockSpec((1, L, F), lambda b, q: (b, 0, 0)),
        ],
        out_specs=pl.BlockSpec((1, LQ, F), lambda b, q: (b, q, 0)),
        compiler_params=pltpu.CompilerParams(
            dimension_semantics=("parallel", "parallel"),
            vmem_limit_bytes=_vmem_limit_bytes(),
        ),
    )(wcat_flat, bcat, beta, x2)


# ----------------------------------------------------------------------------
# rsaBlock forward.  ModuleList order in PyTorch: [coronal, sagittal, axial].
# Each pass wants the attended axis right after batch; the ordering of the
# remaining (C, spatial, spatial) dims inside the flattened feature axis is
# irrelevant to the math as long as theta/phi/g/x all use the same one.
# Exactly one direct layout->layout transpose is emitted per pass boundary.
# ----------------------------------------------------------------------------
_PASS_ORDERS = (
    (0, 3, 1, 2, 4),   # coronal : attend over H -> (B, H, C, D, W)
    (0, 4, 1, 2, 3),   # sagittal: attend over W -> (B, W, C, D, H)
    (0, 2, 1, 3, 4),   # axial   : attend over D -> (B, D, C, H, W)
)


@jax.jit
def rsa_block_forward(x, params):
    C = x.shape[1]
    wcat = jnp.concatenate(
        [params["theta_w"], params["phi_w"], params["g_w"]], axis=0)   # (3C, C)
    wcat_flat = wcat.reshape(-1)                                        # (3C*C,)
    bcat = jnp.concatenate(
        [params["theta_b"], params["phi_b"], params["g_b"]])            # (3C,)

    cur = (0, 1, 2, 3, 4)
    x5 = x
    for idx, target in enumerate(_PASS_ORDERS):
        x5 = jnp.transpose(x5, tuple(cur.index(a) for a in target))
        cur = target
        B, L = x5.shape[0], x5.shape[1]
        rest = x5.shape[2:]                         # (C, s1, s2)
        R = rest[1] * rest[2]
        beta = params["betas"][idx].reshape(1)      # static index, no dyn slice
        x2 = _rsa_axis_pass(x5.reshape(B, L, C * R), wcat_flat, bcat, beta,
                            C=C, R=R)
        x5 = x2.reshape((B, L) + rest)
    return jnp.transpose(x5, tuple(cur.index(a) for a in (0, 1, 2, 3, 4)))


# ----------------------------------------------------------------------------
# Pure-JAX reference mirroring the PyTorch forward exactly (for correctness).
# ----------------------------------------------------------------------------
_REF_PERMS = (
    (0, 3, 2, 1, 4),  # coronal
    (0, 4, 2, 3, 1),  # sagittal
    (0, 2, 1, 3, 4),  # axial
)


def _ref_forward(x, params):
    def conv(xx, w, b):
        return jnp.einsum("bcdhw,oc->bodhw", xx, w) + b[None, :, None, None, None]

    for idx, perm in enumerate(_REF_PERMS):
        theta = conv(x, params["theta_w"], params["theta_b"])
        phi = conv(x, params["phi_w"], params["phi_b"])
        g = conv(x, params["g_w"], params["g_b"])
        B = x.shape[0]
        pshape = jnp.transpose(g, perm).shape
        L = pshape[1]
        t2 = jnp.transpose(theta, perm).reshape(B, L, -1)
        p2 = jnp.transpose(phi, perm).reshape(B, L, -1)
        g2 = jnp.transpose(g, perm).reshape(B, L, -1)
        attn = jax.nn.softmax(jnp.einsum("blf,bmf->blm", t2, p2), axis=-1)
        out2 = jnp.einsum("blm,bmf->blf", attn, g2)
        out = jnp.transpose(out2.reshape(pshape), perm)  # these perms are self-inverse
        x = x + out * params["betas"][idx]
    return x


# ----------------------------------------------------------------------------
# main
# ----------------------------------------------------------------------------
if __name__ == "__main__":
    B, C, D, H, W = 2, 4, 16, 16, 16
    key = jax.random.PRNGKey(0)
    k = jax.random.split(key, 8)

    x = jax.random.normal(k[0], (B, C, D, H, W), dtype=jnp.float32)

    # Conv3d weights (C, C, 1, 1, 1) -> (C, C).  PyTorch init has betas = 0.0;
    # use small nonzero betas so the attention path actually contributes here.
    params = {
        "theta_w": 0.1 * jax.random.normal(k[1], (C, C), dtype=jnp.float32),
        "theta_b": 0.1 * jax.random.normal(k[2], (C,), dtype=jnp.float32),
        "phi_w": 0.1 * jax.random.normal(k[3], (C, C), dtype=jnp.float32),
        "phi_b": 0.1 * jax.random.normal(k[4], (C,), dtype=jnp.float32),
        "g_w": 0.1 * jax.random.normal(k[5], (C, C), dtype=jnp.float32),
        "g_b": 0.1 * jax.random.normal(k[6], (C,), dtype=jnp.float32),
        "betas": jnp.array([0.3, 0.2, 0.1], dtype=jnp.float32),
    }

    out = jax.block_until_ready(rsa_block_forward(x, params))
    ref = _ref_forward(x, params)

    assert out.shape == (B, C, D, H, W)
    err = float(jnp.max(jnp.abs(out - ref)))
    # bf16 MXU operands (scores, attn@G) with f32 accumulation + f32 softmax.
    assert jnp.allclose(out, ref, rtol=2e-2, atol=2e-2), err
    print("KERNEL_OK")
</pallas_src>

<mosaic_0001>
module attributes {stable_mosaic.version = 11 : i64} {
  func.func @_rsa_pass_kernel(%arg0: i32, %arg1: i32, %arg2: memref<48xf32, #tpu.memory_space<smem>>, %arg3: memref<12xf32, #tpu.memory_space<smem>>, %arg4: memref<1xf32, #tpu.memory_space<smem>>, %arg5: memref<1x16x1024xf32, #tpu.memory_space<vmem>>, %arg6: memref<1x8x1024xf32, #tpu.memory_space<vmem>>) attributes {dimension_semantics = [#tpu.dimension_semantics<parallel>, #tpu.dimension_semantics<parallel>], iteration_bounds = array<i64: 2, 2>, scalar_prefetch = 0 : i64, scratch_operands = 0 : i64, tpu.core_type = #tpu.core_type<tc>, window_params = [{transform_indices = @transform_0, window_bounds = array<i64: 48>}, {transform_indices = @transform_1, window_bounds = array<i64: 12>}, {transform_indices = @transform_2, window_bounds = array<i64: 1>}, {transform_indices = @transform_3, window_bounds = array<i64: 1, 16, 1024>}, {transform_indices = @transform_4, window_bounds = array<i64: 1, 8, 1024>}]} {
    %c8_i32 = arith.constant 8 : i32
    %0 = arith.muli %arg1, %c8_i32 : i32
    %1 = tpu.assume_multiple %0, 8 : i32
    %c0 = arith.constant 0 : index
    %c0_0 = arith.constant 0 : index
    %c0_1 = arith.constant 0 : index
    %2 = vector.load %arg5[%c0, %c0_0, %c0_1] : memref<1x16x1024xf32, #tpu.memory_space<vmem>>, vector<1x16x1024xf32>
    %3 = vector.shape_cast %2 : vector<1x16x1024xf32> to vector<16x1024xf32>
    %c0_2 = arith.constant 0 : index
    %4 = arith.index_cast %1 : i32 to index
    %c0_3 = arith.constant 0 : index
    %5 = vector.load %arg5[%c0_2, %4, %c0_3] : memref<1x16x1024xf32, #tpu.memory_space<vmem>>, vector<1x8x1024xf32>
    %6 = vector.shape_cast %5 : vector<1x8x1024xf32> to vector<8x1024xf32>
    %7 = vector.extract_strided_slice %3 {offsets = [0, 0], sizes = [16, 256], strides = [1, 1]} : vector<16x1024xf32> to vector<16x256xf32>
    %8 = vector.extract_strided_slice %3 {offsets = [0, 256], sizes = [16, 256], strides = [1, 1]} : vector<16x1024xf32> to vector<16x256xf32>
    %9 = vector.extract_strided_slice %3 {offsets = [0, 512], sizes = [16, 256], strides = [1, 1]} : vector<16x1024xf32> to vector<16x256xf32>
    %10 = vector.extract_strided_slice %3 {offsets = [0, 768], sizes = [16, 256], strides = [1, 1]} : vector<16x1024xf32> to vector<16x256xf32>
    %11 = vector.extract_strided_slice %6 {offsets = [0, 0], sizes = [8, 256], strides = [1, 1]} : vector<8x1024xf32> to vector<8x256xf32>
    %12 = vector.extract_strided_slice %6 {offsets = [0, 256], sizes = [8, 256], strides = [1, 1]} : vector<8x1024xf32> to vector<8x256xf32>
    %13 = vector.extract_strided_slice %6 {offsets = [0, 512], sizes = [8, 256], strides = [1, 1]} : vector<8x1024xf32> to vector<8x256xf32>
    %14 = vector.extract_strided_slice %6 {offsets = [0, 768], sizes = [8, 256], strides = [1, 1]} : vector<8x1024xf32> to vector<8x256xf32>
    %c0_4 = arith.constant 0 : index
    %15 = memref.load %arg2[%c0_4] : memref<48xf32, #tpu.memory_space<smem>>
    %16 = vector.broadcast %15 : f32 to vector<8x256xf32>
    %17 = arith.mulf %11, %16 : vector<8x256xf32>
    %c1 = arith.constant 1 : index
    %18 = memref.load %arg2[%c1] : memref<48xf32, #tpu.memory_space<smem>>
    %19 = vector.broadcast %18 : f32 to vector<8x256xf32>
    %20 = arith.mulf %12, %19 : vector<8x256xf32>
    %21 = arith.addf %17, %20 : vector<8x256xf32>
    %c2 = arith.constant 2 : index
    %22 = memref.load %arg2[%c2] : memref<48xf32, #tpu.memory_space<smem>>
    %23 = vector.broadcast %22 : f32 to vector<8x256xf32>
    %24 = arith.mulf %13, %23 : vector<8x256xf32>
    %25 = arith.addf %21, %24 : vector<8x256xf32>
    %c3 = arith.constant 3 : index
    %26 = memref.load %arg2[%c3] : memref<48xf32, #tpu.memory_space<smem>>
    %27 = vector.broadcast %26 : f32 to vector<8x256xf32>
    %28 = arith.mulf %14, %27 : vector<8x256xf32>
    %29 = arith.addf %25, %28 : vector<8x256xf32>
    %c0_5 = arith.constant 0 : index
    %30 = memref.load %arg3[%c0_5] : memref<12xf32, #tpu.memory_space<smem>>
    %31 = vector.broadcast %30 : f32 to vector<8x256xf32>
    %32 = arith.addf %29, %31 : vector<8x256xf32>
    %33 = arith.truncf %32 : vector<8x256xf32> to vector<8x256xbf16>
    %c4 = arith.constant 4 : index
    %34 = memref.load %arg2[%c4] : memref<48xf32, #tpu.memory_space<smem>>
    %35 = vector.broadcast %34 : f32 to vector<8x256xf32>
    %36 = arith.mulf %11, %35 : vector<8x256xf32>
    %c5 = arith.constant 5 : index
    %37 = memref.load %arg2[%c5] : memref<48xf32, #tpu.memory_space<smem>>
    %38 = vector.broadcast %37 : f32 to vector<8x256xf32>
    %39 = arith.mulf %12, %38 : vector<8x256xf32>
    %40 = arith.addf %36, %39 : vector<8x256xf32>
    %c6 = arith.constant 6 : index
    %41 = memref.load %arg2[%c6] : memref<48xf32, #tpu.memory_space<smem>>
    %42 = vector.broadcast %41 : f32 to vector<8x256xf32>
    %43 = arith.mulf %13, %42 : vector<8x256xf32>
    %44 = arith.addf %40, %43 : vector<8x256xf32>
    %c7 = arith.constant 7 : index
    %45 = memref.load %arg2[%c7] : memref<48xf32, #tpu.memory_space<smem>>
    %46 = vector.broadcast %45 : f32 to vector<8x256xf32>
    %47 = arith.mulf %14, %46 : vector<8x256xf32>
    %48 = arith.addf %44, %47 : vector<8x256xf32>
    %c1_6 = arith.constant 1 : index
    %49 = memref.load %arg3[%c1_6] : memref<12xf32, #tpu.memory_space<smem>>
    %50 = vector.broadcast %49 : f32 to vector<8x256xf32>
    %51 = arith.addf %48, %50 : vector<8x256xf32>
    %52 = arith.truncf %51 : vector<8x256xf32> to vector<8x256xbf16>
    %c8 = arith.constant 8 : index
    %53 = memref.load %arg2[%c8] : memref<48xf32, #tpu.memory_space<smem>>
    %54 = vector.broadcast %53 : f32 to vector<8x256xf32>
    %55 = arith.mulf %11, %54 : vector<8x256xf32>
    %c9 = arith.constant 9 : index
    %56 = memref.load %arg2[%c9] : memref<48xf32, #tpu.memory_space<smem>>
    %57 = vector.broadcast %56 : f32 to vector<8x256xf32>
    %58 = arith.mulf %12, %57 : vector<8x256xf32>
    %59 = arith.addf %55, %58 : vector<8x256xf32>
    %c10 = arith.constant 10 : index
    %60 = memref.load %arg2[%c10] : memref<48xf32, #tpu.memory_space<smem>>
    %61 = vector.broadcast %60 : f32 to vector<8x256xf32>
    %62 = arith.mulf %13, %61 : vector<8x256xf32>
    %63 = arith.addf %59, %62 : vector<8x256xf32>
    %c11 = arith.constant 11 : index
    %64 = memref.load %arg2[%c11] : memref<48xf32, #tpu.memory_space<smem>>
    %65 = vector.broadcast %64 : f32 to vector<8x256xf32>
    %66 = arith.mulf %14, %65 : vector<8x256xf32>
    %67 = arith.addf %63, %66 : vector<8x256xf32>
    %c2_7 = arith.constant 2 : index
    %68 = memref.load %arg3[%c2_7] : memref<12xf32, #tpu.memory_space<smem>>
    %69 = vector.broadcast %68 : f32 to vector<8x256xf32>
    %70 = arith.addf %67, %69 : vector<8x256xf32>
    %71 = arith.truncf %70 : vector<8x256xf32> to vector<8x256xbf16>
    %c12 = arith.constant 12 : index
    %72 = memref.load %arg2[%c12] : memref<48xf32, #tpu.memory_space<smem>>
    %73 = vector.broadcast %72 : f32 to vector<8x256xf32>
    %74 = arith.mulf %11, %73 : vector<8x256xf32>
    %c13 = arith.constant 13 : index
    %75 = memref.load %arg2[%c13] : memref<48xf32, #tpu.memory_space<smem>>
    %76 = vector.broadcast %75 : f32 to vector<8x256xf32>
    %77 = arith.mulf %12, %76 : vector<8x256xf32>
    %78 = arith.addf %74, %77 : vector<8x256xf32>
    %c14 = arith.constant 14 : index
    %79 = memref.load %arg2[%c14] : memref<48xf32, #tpu.memory_space<smem>>
    %80 = vector.broadcast %79 : f32 to vector<8x256xf32>
    %81 = arith.mulf %13, %80 : vector<8x256xf32>
    %82 = arith.addf %78, %81 : vector<8x256xf32>
    %c15 = arith.constant 15 : index
    %83 = memref.load %arg2[%c15] : memref<48xf32, #tpu.memory_space<smem>>
    %84 = vector.broadcast %83 : f32 to vector<8x256xf32>
    %85 = arith.mulf %14, %84 : vector<8x256xf32>
    %86 = arith.addf %82, %85 : vector<8x256xf32>
    %c3_8 = arith.constant 3 : index
    %87 = memref.load %arg3[%c3_8] : memref<12xf32, #tpu.memory_space<smem>>
    %88 = vector.broadcast %87 : f32 to vector<8x256xf32>
    %89 = arith.addf %86, %88 : vector<8x256xf32>
    %90 = arith.truncf %89 : vector<8x256xf32> to vector<8x256xbf16>
    %91 = tpu.concatenate %33, %52, %71, %90 in 1 : vector<8x256xbf16>, vector<8x256xbf16>, vector<8x256xbf16>, vector<8x256xbf16> -> vector<8x1024xbf16>
    %c16 = arith.constant 16 : index
    %92 = memref.load %arg2[%c16] : memref<48xf32, #tpu.memory_space<smem>>
    %93 = vector.broadcast %92 : f32 to vector<16x256xf32>
    %94 = arith.mulf %7, %93 : vector<16x256xf32>
    %c17 = arith.constant 17 : index
    %95 = memref.load %arg2[%c17] : memref<48xf32, #tpu.memory_space<smem>>
    %96 = vector.broadcast %95 : f32 to vector<16x256xf32>
    %97 = arith.mulf %8, %96 : vector<16x256xf32>
    %98 = arith.addf %94, %97 : vector<16x256xf32>
    %c18 = arith.constant 18 : index
    %99 = memref.load %arg2[%c18] : memref<48xf32, #tpu.memory_space<smem>>
    %100 = vector.broadcast %99 : f32 to vector<16x256xf32>
    %101 = arith.mulf %9, %100 : vector<16x256xf32>
    %102 = arith.addf %98, %101 : vector<16x256xf32>
    %c19 = arith.constant 19 : index
    %103 = memref.load %arg2[%c19] : memref<48xf32, #tpu.memory_space<smem>>
    %104 = vector.broadcast %103 : f32 to vector<16x256xf32>
    %105 = arith.mulf %10, %104 : vector<16x256xf32>
    %106 = arith.addf %102, %105 : vector<16x256xf32>
    %c4_9 = arith.constant 4 : index
    %107 = memref.load %arg3[%c4_9] : memref<12xf32, #tpu.memory_space<smem>>
    %108 = vector.broadcast %107 : f32 to vector<16x256xf32>
    %109 = arith.addf %106, %108 : vector<16x256xf32>
    %110 = arith.truncf %109 : vector<16x256xf32> to vector<16x256xbf16>
    %c20 = arith.constant 20 : index
    %111 = memref.load %arg2[%c20] : memref<48xf32, #tpu.memory_space<smem>>
    %112 = vector.broadcast %111 : f32 to vector<16x256xf32>
    %113 = arith.mulf %7, %112 : vector<16x256xf32>
    %c21 = arith.constant 21 : index
    %114 = memref.load %arg2[%c21] : memref<48xf32, #tpu.memory_space<smem>>
    %115 = vector.broadcast %114 : f32 to vector<16x256xf32>
    %116 = arith.mulf %8, %115 : vector<16x256xf32>
    %117 = arith.addf %113, %116 : vector<16x256xf32>
    %c22 = arith.constant 22 : index
    %118 = memref.load %arg2[%c22] : memref<48xf32, #tpu.memory_space<smem>>
    %119 = vector.broadcast %118 : f32 to vector<16x256xf32>
    %120 = arith.mulf %9, %119 : vector<16x256xf32>
    %121 = arith.addf %117, %120 : vector<16x256xf32>
    %c23 = arith.constant 23 : index
    %122 = memref.load %arg2[%c23] : memref<48xf32, #tpu.memory_space<smem>>
    %123 = vector.broadcast %122 : f32 to vector<16x256xf32>
    %124 = arith.mulf %10, %123 : vector<16x256xf32>
    %125 = arith.addf %121, %124 : vector<16x256xf32>
    %c5_10 = arith.constant 5 : index
    %126 = memref.load %arg3[%c5_10] : memref<12xf32, #tpu.memory_space<smem>>
    %127 = vector.broadcast %126 : f32 to vector<16x256xf32>
    %128 = arith.addf %125, %127 : vector<16x256xf32>
    %129 = arith.truncf %128 : vector<16x256xf32> to vector<16x256xbf16>
    %c24 = arith.constant 24 : index
    %130 = memref.load %arg2[%c24] : memref<48xf32, #tpu.memory_space<smem>>
    %131 = vector.broadcast %130 : f32 to vector<16x256xf32>
    %132 = arith.mulf %7, %131 : vector<16x256xf32>
    %c25 = arith.constant 25 : index
    %133 = memref.load %arg2[%c25] : memref<48xf32, #tpu.memory_space<smem>>
    %134 = vector.broadcast %133 : f32 to vector<16x256xf32>
    %135 = arith.mulf %8, %134 : vector<16x256xf32>
    %136 = arith.addf %132, %135 : vector<16x256xf32>
    %c26 = arith.constant 26 : index
    %137 = memref.load %arg2[%c26] : memref<48xf32, #tpu.memory_space<smem>>
    %138 = vector.broadcast %137 : f32 to vector<16x256xf32>
    %139 = arith.mulf %9, %138 : vector<16x256xf32>
    %140 = arith.addf %136, %139 : vector<16x256xf32>
    %c27 = arith.constant 27 : index
    %141 = memref.load %arg2[%c27] : memref<48xf32, #tpu.memory_space<smem>>
    %142 = vector.broadcast %141 : f32 to vector<16x256xf32>
    %143 = arith.mulf %10, %142 : vector<16x256xf32>
    %144 = arith.addf %140, %143 : vector<16x256xf32>
    %c6_11 = arith.constant 6 : index
    %145 = memref.load %arg3[%c6_11] : memref<12xf32, #tpu.memory_space<smem>>
    %146 = vector.broadcast %145 : f32 to vector<16x256xf32>
    %147 = arith.addf %144, %146 : vector<16x256xf32>
    %148 = arith.truncf %147 : vector<16x256xf32> to vector<16x256xbf16>
    %c28 = arith.constant 28 : index
    %149 = memref.load %arg2[%c28] : memref<48xf32, #tpu.memory_space<smem>>
    %150 = vector.broadcast %149 : f32 to vector<16x256xf32>
    %151 = arith.mulf %7, %150 : vector<16x256xf32>
    %c29 = arith.constant 29 : index
    %152 = memref.load %arg2[%c29] : memref<48xf32, #tpu.memory_space<smem>>
    %153 = vector.broadcast %152 : f32 to vector<16x256xf32>
    %154 = arith.mulf %8, %153 : vector<16x256xf32>
    %155 = arith.addf %151, %154 : vector<16x256xf32>
    %c30 = arith.constant 30 : index
    %156 = memref.load %arg2[%c30] : memref<48xf32, #tpu.memory_space<smem>>
    %157 = vector.broadcast %156 : f32 to vector<16x256xf32>
    %158 = arith.mulf %9, %157 : vector<16x256xf32>
    %159 = arith.addf %155, %158 : vector<16x256xf32>
    %c31 = arith.constant 31 : index
    %160 = memref.load %arg2[%c31] : memref<48xf32, #tpu.memory_space<smem>>
    %161 = vector.broadcast %160 : f32 to vector<16x256xf32>
    %162 = arith.mulf %10, %161 : vector<16x256xf32>
    %163 = arith.addf %159, %162 : vector<16x256xf32>
    %c7_12 = arith.constant 7 : index
    %164 = memref.load %arg3[%c7_12] : memref<12xf32, #tpu.memory_space<smem>>
    %165 = vector.broadcast %164 : f32 to vector<16x256xf32>
    %166 = arith.addf %163, %165 : vector<16x256xf32>
    %167 = arith.truncf %166 : vector<16x256xf32> to vector<16x256xbf16>
    %168 = tpu.concatenate %110, %129, %148, %167 in 1 : vector<16x256xbf16>, vector<16x256xbf16>, vector<16x256xbf16>, vector<16x256xbf16> -> vector<16x1024xbf16>
    %c32 = arith.constant 32 : index
    %169 = memref.load %arg2[%c32] : memref<48xf32, #tpu.memory_space<smem>>
    %170 = vector.broadcast %169 : f32 to vector<16x256xf32>
    %171 = arith.mulf %7, %170 : vector<16x256xf32>
    %c33 = arith.constant 33 : index
    %172 = memref.load %arg2[%c33] : memref<48xf32, #tpu.memory_space<smem>>
    %173 = vector.broadcast %172 : f32 to vector<16x256xf32>
    %174 = arith.mulf %8, %173 : vector<16x256xf32>
    %175 = arith.addf %171, %174 : vector<16x256xf32>
    %c34 = arith.constant 34 : index
    %176 = memref.load %arg2[%c34] : memref<48xf32, #tpu.memory_space<smem>>
    %177 = vector.broadcast %176 : f32 to vector<16x256xf32>
    %178 = arith.mulf %9, %177 : vector<16x256xf32>
    %179 = arith.addf %175, %178 : vector<16x256xf32>
    %c35 = arith.constant 35 : index
    %180 = memref.load %arg2[%c35] : memref<48xf32, #tpu.memory_space<smem>>
    %181 = vector.broadcast %180 : f32 to vector<16x256xf32>
    %182 = arith.mulf %10, %181 : vector<16x256xf32>
    %183 = arith.addf %179, %182 : vector<16x256xf32>
    %c8_13 = arith.constant 8 : index
    %184 = memref.load %arg3[%c8_13] : memref<12xf32, #tpu.memory_space<smem>>
    %185 = vector.broadcast %184 : f32 to vector<16x256xf32>
    %186 = arith.addf %183, %185 : vector<16x256xf32>
    %187 = arith.truncf %186 : vector<16x256xf32> to vector<16x256xbf16>
    %c36 = arith.constant 36 : index
    %188 = memref.load %arg2[%c36] : memref<48xf32, #tpu.memory_space<smem>>
    %189 = vector.broadcast %188 : f32 to vector<16x256xf32>
    %190 = arith.mulf %7, %189 : vector<16x256xf32>
    %c37 = arith.constant 37 : index
    %191 = memref.load %arg2[%c37] : memref<48xf32, #tpu.memory_space<smem>>
    %192 = vector.broadcast %191 : f32 to vector<16x256xf32>
    %193 = arith.mulf %8, %192 : vector<16x256xf32>
    %194 = arith.addf %190, %193 : vector<16x256xf32>
    %c38 = arith.constant 38 : index
    %195 = memref.load %arg2[%c38] : memref<48xf32, #tpu.memory_space<smem>>
    %196 = vector.broadcast %195 : f32 to vector<16x256xf32>
    %197 = arith.mulf %9, %196 : vector<16x256xf32>
    %198 = arith.addf %194, %197 : vector<16x256xf32>
    %c39 = arith.constant 39 : index
    %199 = memref.load %arg2[%c39] : memref<48xf32, #tpu.memory_space<smem>>
    %200 = vector.broadcast %199 : f32 to vector<16x256xf32>
    %201 = arith.mulf %10, %200 : vector<16x256xf32>
    %202 = arith.addf %198, %201 : vector<16x256xf32>
    %c9_14 = arith.constant 9 : index
    %203 = memref.load %arg3[%c9_14] : memref<12xf32, #tpu.memory_space<smem>>
    %204 = vector.broadcast %203 : f32 to vector<16x256xf32>
    %205 = arith.addf %202, %204 : vector<16x256xf32>
    %206 = arith.truncf %205 : vector<16x256xf32> to vector<16x256xbf16>
    %c40 = arith.constant 40 : index
    %207 = memref.load %arg2[%c40] : memref<48xf32, #tpu.memory_space<smem>>
    %208 = vector.broadcast %207 : f32 to vector<16x256xf32>
    %209 = arith.mulf %7, %208 : vector<16x256xf32>
    %c41 = arith.constant 41 : index
    %210 = memref.load %arg2[%c41] : memref<48xf32, #tpu.memory_space<smem>>
    %211 = vector.broadcast %210 : f32 to vector<16x256xf32>
    %212 = arith.mulf %8, %211 : vector<16x256xf32>
    %213 = arith.addf %209, %212 : vector<16x256xf32>
    %c42 = arith.constant 42 : index
    %214 = memref.load %arg2[%c42] : memref<48xf32, #tpu.memory_space<smem>>
    %215 = vector.broadcast %214 : f32 to vector<16x256xf32>
    %216 = arith.mulf %9, %215 : vector<16x256xf32>
    %217 = arith.addf %213, %216 : vector<16x256xf32>
    %c43 = arith.constant 43 : index
    %218 = memref.load %arg2[%c43] : memref<48xf32, #tpu.memory_space<smem>>
    %219 = vector.broadcast %218 : f32 to vector<16x256xf32>
    %220 = arith.mulf %10, %219 : vector<16x256xf32>
    %221 = arith.addf %217, %220 : vector<16x256xf32>
    %c10_15 = arith.constant 10 : index
    %222 = memref.load %arg3[%c10_15] : memref<12xf32, #tpu.memory_space<smem>>
    %223 = vector.broadcast %222 : f32 to vector<16x256xf32>
    %224 = arith.addf %221, %223 : vector<16x256xf32>
    %225 = arith.truncf %224 : vector<16x256xf32> to vector<16x256xbf16>
    %c44 = arith.constant 44 : index
    %226 = memref.load %arg2[%c44] : memref<48xf32, #tpu.memory_space<smem>>
    %227 = vector.broadcast %226 : f32 to vector<16x256xf32>
    %228 = arith.mulf %7, %227 : vector<16x256xf32>
    %c45 = arith.constant 45 : index
    %229 = memref.load %arg2[%c45] : memref<48xf32, #tpu.memory_space<smem>>
    %230 = vector.broadcast %229 : f32 to vector<16x256xf32>
    %231 = arith.mulf %8, %230 : vector<16x256xf32>
    %232 = arith.addf %228, %231 : vector<16x256xf32>
    %c46 = arith.constant 46 : index
    %233 = memref.load %arg2[%c46] : memref<48xf32, #tpu.memory_space<smem>>
    %234 = vector.broadcast %233 : f32 to vector<16x256xf32>
    %235 = arith.mulf %9, %234 : vector<16x256xf32>
    %236 = arith.addf %232, %235 : vector<16x256xf32>
    %c47 = arith.constant 47 : index
    %237 = memref.load %arg2[%c47] : memref<48xf32, #tpu.memory_space<smem>>
    %238 = vector.broadcast %237 : f32 to vector<16x256xf32>
    %239 = arith.mulf %10, %238 : vector<16x256xf32>
    %240 = arith.addf %236, %239 : vector<16x256xf32>
    %c11_16 = arith.constant 11 : index
    %241 = memref.load %arg3[%c11_16] : memref<12xf32, #tpu.memory_space<smem>>
    %242 = vector.broadcast %241 : f32 to vector<16x256xf32>
    %243 = arith.addf %240, %242 : vector<16x256xf32>
    %244 = arith.truncf %243 : vector<16x256xf32> to vector<16x256xbf16>
    %245 = tpu.concatenate %187, %206, %225, %244 in 1 : vector<16x256xbf16>, vector<16x256xbf16>, vector<16x256xbf16>, vector<16x256xbf16> -> vector<16x1024xbf16>
    %cst = arith.constant dense<0.000000e+00> : vector<8x16xf32>
    %246 = tpu.matmul %91, %168, %cst {dimension_numbers = #tpu.dot_dimension_numbers<[1], [1], [0], [0], [0, 0, 1, 0], [], []>} : vector<8x1024xbf16>, vector<16x1024xbf16>, vector<8x16xf32> -> vector<8x16xf32>
    %cst_17 = arith.constant dense<0xFF800000> : vector<8xf32>
    %247 = vector.multi_reduction <maximumf>, %246, %cst_17 [1] : vector<8x16xf32> to vector<8xf32>
    %248 = vector.shape_cast %247 : vector<8xf32> to vector<8x1xf32>
    %249 = vector.broadcast %248 : vector<8x1xf32> to vector<8x16xf32>
    %250 = arith.subf %246, %249 : vector<8x16xf32>
    %251 = math.exp %250 : vector<8x16xf32>
    %cst_18 = arith.constant dense<0.000000e+00> : vector<8xf32>
    %252 = vector.multi_reduction <add>, %251, %cst_18 [1] : vector<8x16xf32> to vector<8xf32>
    %253 = vector.shape_cast %252 : vector<8xf32> to vector<8x1xf32>
    %254 = tpu.reciprocal %253 {approx = true} : vector<8x1xf32> -> vector<8x1xf32>
    %255 = vector.broadcast %254 : vector<8x1xf32> to vector<8x16xf32>
    %256 = arith.mulf %251, %255 : vector<8x16xf32>
    %257 = arith.truncf %256 : vector<8x16xf32> to vector<8x16xbf16>
    %cst_19 = arith.constant dense<0.000000e+00> : vector<8x1024xf32>
    %258 = tpu.matmul %257, %245, %cst_19 {dimension_numbers = #tpu.dot_dimension_numbers<[1], [0], [0], [1], [0, 0, 1, 1], [], []>} : vector<8x16xbf16>, vector<16x1024xbf16>, vector<8x1024xf32> -> vector<8x1024xf32>
    %c0_20 = arith.constant 0 : index
    %259 = memref.load %arg4[%c0_20] : memref<1xf32, #tpu.memory_space<smem>>
    %260 = vector.broadcast %259 : f32 to vector<8x1024xf32>
    %261 = arith.mulf %260, %258 : vector<8x1024xf32>
    %262 = arith.addf %6, %261 : vector<8x1024xf32>
    %c0_21 = arith.constant 0 : index
    %c0_22 = arith.constant 0 : index
    %c0_23 = arith.constant 0 : index
    %263 = vector.load %arg6[%c0_21, %c0_22, %c0_23] : memref<1x8x1024xf32, #tpu.memory_space<vmem>>, vector<1x8x1024xf32>
    %264 = vector.shape_cast %263 : vector<1x8x1024xf32> to vector<8x1024xf32>
    %265 = vector.shape_cast %262 : vector<8x1024xf32> to vector<1x8x1024xf32>
    tpu.vector_store %arg6[%c0_21, %c0_22, %c0_23], %265 {strides = array<i32>} : memref<1x8x1024xf32, #tpu.memory_space<vmem>>, vector<1x8x1024xf32>,
    return
  }
  func.func @transform_0(%arg0: i32, %arg1: i32) -> i32 {
    %c0_i32 = arith.constant 0 : i32
    %c0_i32_0 = arith.constant 0 : i32
    return %c0_i32 : i32
  }
  func.func @transform_1(%arg0: i32, %arg1: i32) -> i32 {
    %c0_i32 = arith.constant 0 : i32
    %c0_i32_0 = arith.constant 0 : i32
    return %c0_i32 : i32
  }
  func.func @transform_2(%arg0: i32, %arg1: i32) -> i32 {
    %c0_i32 = arith.constant 0 : i32
    %c0_i32_0 = arith.constant 0 : i32
    return %c0_i32 : i32
  }
  func.func @transform_3(%arg0: i32, %arg1: i32) -> (i32, i32, i32) {
    %c0_i32 = arith.constant 0 : i32
    %c0_i32_0 = arith.constant 0 : i32
    %c0_i32_1 = arith.constant 0 : i32
    return %arg0, %c0_i32, %c0_i32_0 : i32, i32, i32
  }
  func.func @transform_4(%arg0: i32, %arg1: i32) -> (i32, i32, i32) {
    %c0_i32 = arith.constant 0 : i32
    %c0_i32_0 = arith.constant 0 : i32
    return %arg0, %arg1, %c0_i32 : i32, i32, i32
  }
}

</mosaic_0001>

<llo_original>
// kernel: rsa_block_forward.3
$region0: #{rsa_block_forward.3}
  #allocation0 [shape = 'u32[]', space=smem, size = 0x4, offset = 0x4, fixed_abs, tag = 'smem constant byte address 0x4 - core index']
  #allocation1 [shape = 'u32[144,128]{1,0:T(1,128)}', space=vmem, size = 0x12000, scoped, tag = 'internal scratch']
  #allocation2 [shape = 'f32[1]{0:T(128)S(6)}', space=smem, size = 0x200, scoped, tag = 'scoped memory for rsa_block_forward.3']
  %s0 = inlined_call_operand.vmem [shape: f32[48], index: 0, kind: input, shape index: {}]
  %s1 = inlined_call_operand.vmem [shape: f32[12], index: 1, kind: input, shape index: {}]
  %s2 = inlined_call_operand.<no memory space> [shape: f32[1], index: 2, kind: input, shape index: {}]
  %s3 = inlined_call_operand.vmem [shape: f32[2,16,1024], index: 3, kind: input, shape index: {}]
  %s4 = inlined_call_operand.vmem [shape: f32[2,16,1024], index: 4, kind: output, shape index: {}]
  %s5 = sld [smem:[#allocation0]]
  $region57: #{rsa_block_forward.3} parent=0
    _
  %s7 = ssub.s32 1, %s5
  %s8 = scalar_select 0, %s7, %s5
  %9 = sst [smem:[#allocation2]] %s2
  $region1: #{rsa_block_forward.3} parent=0
    #allocation3 [shape = 'u8[512]{0}', space=smem, size = 0x200, scoped, tag = 'input window, operand 0, single buffered']
    #allocation4 [shape = 's32[2]{0}', space=sflag, size = 0x8, scoped, tag = 'scoped memory for rsa_block_forward.3']
    #allocation5 [shape = 'u8[512]{0}', space=smem, size = 0x200, scoped, tag = 'input window, operand 1, single buffered']
    #allocation6 [shape = 's32[1]{0}', space=sflag, size = 0x4, scoped, tag = 'scoped memory for rsa_block_forward.3']
    %10 = vsyncpa [#allocation4], 0
    %11 = vsyncpa [#allocation6], 0
    loop: start=0, step=1, limit=6
    $region2: #{rsa_block_forward.3} parent=1 // loop_pre_header
      _
    $region3: #{rsa_block_forward.3} parent=1 // loop_header
      %s13 = sphi 0, %s17
      %p14 = scmp.ge.s32.totalorder %s13, 6
      %s20 = sphi 0, %s32
      %s21 = sphi 0, %s28
      %s22 = sphi 0, %s20
      %s23 = sphi 0, %s21
      %s24 = sphi 0, %s22
      %s25 = sphi 0, %s23
      %s33 = sphi 0, %s33
      %s35 = sphi 0, %s33
      %s36 = sphi 0, %s35
      %s50 = sphi 0, %s36
      %s54 = sphi 0, %s54
      %s56 = sphi 0, %s54
      %s57 = sphi 0, %s56
      %s71 = sphi 0, %s57
      %s75 = sphi 0, %s75
      %s77 = sphi 0, %s75
      %s78 = sphi 0, %s77
      %s92 = sphi 0, %s78
      %s98 = sphi 0, %s100
      %s101 = sphi 0, %s98
      %s102 = sphi 0, %s101
      %s118 = sphi 0, %s102
      %s126 = sphi 0, %s128
      %s129 = sphi 0, %s126
      %s130 = sphi 0, %s129
      %s146 = sphi 0, %s130
    $region4: #{rsa_block_forward.3} parent=1 // loop_header_branch
      %16 = sbr.rel (%p14) target = $region8
    $region5: #{rsa_block_forward.3} parent=1 // loop_body
      %s18 = ssub.s32 %s13, 1
      %s19 = ssub.s32 %s13, 2
      %s26 = sadd.s32 1, %s21
      %p27 = scmp.ge.s32.totalorder %s26, 2
      %s28 = scalar_select %p27, 0, %s26
      %s29 = sadd.s32 1, %s20
      %s30 = scalar_select %p27, %s29, %s20
      %p31 = scmp.ge.s32.totalorder %s30, 2
      %s32 = scalar_select %p31, 0, %s30
      %s34 = sadd.s32 %s33, 1
      %p37 = scmp.eq.s32.totalorder %s13, 3
      %p38 = scmp.ne.s32.totalorder %s33, %s35
      %p39 = scmp.eq.s32.totalorder %s13, 0
      %p40 = por %p38, %p39
      %p41 = scmp.ne.s32.totalorder %s33, %s35
      %p42 = scmp.eq.s32.totalorder %s18, 3
      %p43 = por %p41, %p42
      %p44 = scmp.ne.s32.totalorder %s35, %s36
      %p45 = scmp.eq.s32.totalorder %s18, 0
      %p46 = por %p44, %p45
      %p47 = scmp.ne.s32.totalorder %s35, %s36
      %p48 = scmp.eq.s32.totalorder %s19, 3
      %p49 = por %p47, %p48
      %p51 = scmp.ne.s32.totalorder %s36, %s50
      %p52 = scmp.eq.s32.totalorder %s19, 0
      %p53 = por %p51, %p52
      %s55 = sadd.s32 %s54, 1
      %p58 = scmp.eq.s32.totalorder %s13, 3
      %p59 = scmp.ne.s32.totalorder %s54, %s56
      %p60 = scmp.eq.s32.totalorder %s13, 0
      %p61 = por %p59, %p60
      %p62 = scmp.ne.s32.totalorder %s54, %s56
      %p63 = scmp.eq.s32.totalorder %s18, 3
      %p64 = por %p62, %p63
      %p65 = scmp.ne.s32.totalorder %s56, %s57
      %p66 = scmp.eq.s32.totalorder %s18, 0
      %p67 = por %p65, %p66
      %p68 = scmp.ne.s32.totalorder %s56, %s57
      %p69 = scmp.eq.s32.totalorder %s19, 3
      %p70 = por %p68, %p69
      %p72 = scmp.ne.s32.totalorder %s57, %s71
      %p73 = scmp.eq.s32.totalorder %s19, 0
      %p74 = por %p72, %p73
      %s76 = sadd.s32 %s75, 1
      %p79 = scmp.eq.s32.totalorder %s13, 3
      %p80 = scmp.ne.s32.totalorder %s75, %s77
      %p81 = scmp.eq.s32.totalorder %s13, 0
      %p82 = por %p80, %p81
      %p83 = scmp.ne.s32.totalorder %s75, %s77
      %p84 = scmp.eq.s32.totalorder %s18, 3
      %p85 = por %p83, %p84
      %p86 = scmp.ne.s32.totalorder %s77, %s78
      %p87 = scmp.eq.s32.totalorder %s18, 0
      %p88 = por %p86, %p87
      %p89 = scmp.ne.s32.totalorder %s77, %s78
      %p90 = scmp.eq.s32.totalorder %s19, 3
      %p91 = por %p89, %p90
      %p93 = scmp.ne.s32.totalorder %s78, %s92
      %p94 = scmp.eq.s32.totalorder %s19, 0
      %p95 = por %p93, %p94
      %s96 = ssub.s32 %s20, %s32
      %p97 = scmp.eq.s32.totalorder %s96, 0
      %s99 = sadd.s32 %s98, 1
      %s100 = scalar_select %p97, %s98, %s99
      %p103 = pneg %p97
      %p104 = scmp.eq.s32.totalorder %s13, 3
      %p105 = por %p103, %p104
      %p106 = scmp.ne.s32.totalorder %s98, %s101
      %p107 = scmp.eq.s32.totalorder %s13, 0
      %p108 = por %p106, %p107
      %p109 = scmp.ne.s32.totalorder %s98, %s101
      %p110 = scmp.eq.s32.totalorder %s18, 3
      %p111 = por %p109, %p110
      %p112 = scmp.ne.s32.totalorder %s101, %s102
      %p113 = scmp.eq.s32.totalorder %s18, 0
      %p114 = por %p112, %p113
      %p115 = scmp.ne.s32.totalorder %s101, %s102
      %p116 = scmp.eq.s32.totalorder %s19, 3
      %p117 = por %p115, %p116
      %p119 = scmp.ne.s32.totalorder %s102, %s118
      %p120 = scmp.eq.s32.totalorder %s19, 0
      %p121 = por %p119, %p120
      %s122 = ssub.s32 %s20, %s32
      %s123 = ssub.s32 %s21, %s28
      %s124 = sor.u32 %s122, %s123
      %p125 = scmp.eq.s32.totalorder %s124, 0
      %s127 = sadd.s32 %s126, 1
      %s128 = scalar_select %p125, %s126, %s127
      %p131 = pneg %p125
      %p132 = scmp.eq.s32.totalorder %s13, 3
      %p133 = por %p131, %p132
      %p134 = scmp.ne.s32.totalorder %s126, %s129
      %p135 = scmp.eq.s32.totalorder %s13, 0
      %p136 = por %p134, %p135
      %p137 = scmp.ne.s32.totalorder %s126, %s129
      %p138 = scmp.eq.s32.totalorder %s18, 3
      %p139 = por %p137, %p138
      %p140 = scmp.ne.s32.totalorder %s129, %s130
      %p141 = scmp.eq.s32.totalorder %s18, 0
      %p142 = por %p140, %p141
      %p143 = scmp.ne.s32.totalorder %s129, %s130
      %p144 = scmp.eq.s32.totalorder %s19, 3
      %p145 = por %p143, %p144
      %p147 = scmp.ne.s32.totalorder %s130, %s146
      %p148 = scmp.eq.s32.totalorder %s19, 0
      %p149 = por %p147, %p148
      %p150 = scmp.le.s32.totalorder 1, %s13
      %p151 = scmp.lt.s32.totalorder %s13, 5
      %p152 = pnand %p150, %p151
      %p153 = pneg %p152
      // Predicated region
      $region9: #{rsa_block_forward.3} parent=5 // pred_check
        _
      $region10: #{rsa_block_forward.3} parent=5 // pred_check_branch
        %155 = sbr.rel (%p152) target = $region12
      $region11: #{rsa_block_forward.3} parent=5 // pred_region
        %s156 = ssub.s32 %s13, 1
        // Predicated region
        $region13: #{rsa_block_forward.3} parent=11 // pred_check
          %p157 = pneg %p46
        $region14: #{rsa_block_forward.3} parent=11 // pred_check_branch
          %159 = sbr.rel (%p157) target = $region16
        $region15: #{rsa_block_forward.3} parent=11 // pred_region
          %s161 = ssub.s32 16, 16
          %162 = vsyncadd [#allocation4], %s161
          %s164 = sshll.u32 %s0, 4
          %s165 = int_to_ptr.vmem [resolvable:$true] %s164
          %167 = dma.vmem_to_smem %s165, 16, [#allocation3], [#allocation4]
        $region16: #{rsa_block_forward.3} parent=11 // pred_fallthru
          _
        // Predicated region
        $region17: #{rsa_block_forward.3} parent=11 // pred_check
          %p168 = pneg %p67
        $region18: #{rsa_block_forward.3} parent=11 // pred_check_branch
          %170 = sbr.rel (%p168) target = $region20
        $region19: #{rsa_block_forward.3} parent=11 // pred_region
          %s172 = ssub.s32 16, 16
          %173 = vsyncadd [#allocation6], %s172
          %s175 = sshll.u32 %s1, 4
          %s176 = int_to_ptr.vmem [resolvable:$true] %s175
          %178 = dma.vmem_to_smem %s176, 16, [#allocation5], [#allocation6]
        $region20: #{rsa_block_forward.3} parent=11 // pred_fallthru
          _
        // Predicated region
        $region21: #{rsa_block_forward.3} parent=11 // pred_check
          %p179 = pneg %p88
        $region22: #{rsa_block_forward.3} parent=11 // pred_check_branch
          %181 = sbr.rel (%p179) target = $region24
        $region23: #{rsa_block_forward.3} parent=11 // pred_region
          _
        $region24: #{rsa_block_forward.3} parent=11 // pred_fallthru
          _
      $region12: #{rsa_block_forward.3} parent=5 // pred_fallthru
        _
      %p182 = scmp.lt.s32.totalorder %s13, 4
      // Predicated region
      $region25: #{rsa_block_forward.3} parent=5 // pred_check
        %p183 = pneg %p182
      $region26: #{rsa_block_forward.3} parent=5 // pred_check_branch
        %185 = sbr.rel (%p183) target = $region28
      $region27: #{rsa_block_forward.3} parent=5 // pred_region
        // Predicated region
        $region29: #{rsa_block_forward.3} parent=27 // pred_check
          %p186 = pneg %p108
        $region30: #{rsa_block_forward.3} parent=27 // pred_check_branch
          %188 = sbr.rel (%p186) target = $region32
        $region31: #{rsa_block_forward.3} parent=27 // pred_region
          %p189 = scmp.lt.s32.totalorder %s20, 1
          %s190 = scalar_select %p189, %s20, 1
          %s191 = smul.addr %s190, 16
          %s192 = smul.addr %s191, 8
          %s193 = scalar_lea.vmem %s3, %s192
        $region32: #{rsa_block_forward.3} parent=27 // pred_fallthru
          _
      $region28: #{rsa_block_forward.3} parent=5 // pred_fallthru
        _
      %p194 = scmp.le.s32.totalorder 1, %s13
      %p195 = scmp.lt.s32.totalorder %s13, 5
      %p196 = pnand %p194, %p195
      %p197 = pneg %p196
      // Predicated region
      $region33: #{rsa_block_forward.3} parent=5 // pred_check
        _
      $region34: #{rsa_block_forward.3} parent=5 // pred_check_branch
        %199 = sbr.rel (%p196) target = $region36
      $region35: #{rsa_block_forward.3} parent=5 // pred_region
        %s200 = ssub.s32 %s13, 1
        // Predicated region
        $region37: #{rsa_block_forward.3} parent=35 // pred_check
          %p201 = pneg %p46
        $region38: #{rsa_block_forward.3} parent=35 // pred_check_branch
          %203 = sbr.rel (%p201) target = $region40
        $region39: #{rsa_block_forward.3} parent=35 // pred_region
          %204 = dma.done [#allocation4], 16
        $region40: #{rsa_block_forward.3} parent=35 // pred_fallthru
          _
        // Predicated region
        $region41: #{rsa_block_forward.3} parent=35 // pred_check
          %p205 = pneg %p67
        $region42: #{rsa_block_forward.3} parent=35 // pred_check_branch
          %207 = sbr.rel (%p205) target = $region44
        $region43: #{rsa_block_forward.3} parent=35 // pred_region
          %208 = dma.done [#allocation6], 16
        $region44: #{rsa_block_forward.3} parent=35 // pred_fallthru
          _
        %209 = sfence
        %p210 = pneg %p46
        %p211 = pneg %p43
        %p212 = pneg %p67
        %p213 = pneg %p64
        %p214 = pneg %p88
        %p215 = pneg %p85
        %p216 = scmp.lt.s32.totalorder %s22, 1
        %s217 = scalar_select %p216, %s22, 1
        %s218 = smul.addr %s217, 16
        %s219 = smul.addr %s218, 8
        %s220 = scalar_lea.vmem %s3, %s219
        %p221 = pneg %p114
        %p222 = pneg %p111
        %p223 = pneg %p142
        %p224 = pneg %p139
        %p225 = scmp.lt.s32.totalorder %s22, 1
        %s226 = scalar_select %p225, %s22, 1
        %p227 = scmp.lt.s32.totalorder %s23, 1
        %s228 = scalar_select %p227, %s23, 1
        %s229 = smul.addr %s228, 8
        %s230 = smul.addr %s226, 16
        %s231 = sadd.s32 %s229, %s230
        %s232 = smul.addr %s231, 8
        %s233 = scalar_lea.vmem %s4, %s232
        %p234 = scmp.lt.s32.totalorder %s22, 1
        %s235 = scalar_select %p234, %s22, 1
        %s236 = smul.addr %s235, 16
        %s237 = smul.addr %s236, 8
        %s238 = scalar_lea.vmem %s3, %s237
        %p239 = scmp.lt.s32.totalorder %s22, 1
        %s240 = scalar_select %p239, %s22, 1
        %p241 = scmp.lt.s32.totalorder %s23, 1
        %s242 = scalar_select %p241, %s23, 1
        %s243 = smul.addr %s242, 8
        %s244 = smul.addr %s240, 16
        %s245 = sadd.s32 %s243, %s244
        %s246 = smul.addr %s245, 8
        %s247 = scalar_lea.vmem %s4, %s246
        %s249 = smul.u32 %s23, 8
        %v250 = vld [vmem:[%s238] sm:$0xff]
        %v251 = vld [vmem:[%s238 + $0x8] sm:$0xff]
        %v252 = vld [vmem:[%s238 + $0x10] sm:$0xff]
        %v253 = vld [vmem:[%s238 + $0x18] sm:$0xff]
        %v254 = vld [vmem:[%s238 + $0x20] sm:$0xff]
        %v255 = vld [vmem:[%s238 + $0x28] sm:$0xff]
        %v256 = vld [vmem:[%s238 + $0x30] sm:$0xff]
        %v257 = vld [vmem:[%s238 + $0x38] sm:$0xff]
        %v258 = vld [vmem:[%s238 + $0x40] sm:$0xff]
        %v259 = vld [vmem:[%s238 + $0x48] sm:$0xff]
        %v260 = vld [vmem:[%s238 + $0x50] sm:$0xff]
        %v261 = vld [vmem:[%s238 + $0x58] sm:$0xff]
        %v262 = vld [vmem:[%s238 + $0x60] sm:$0xff]
        %v263 = vld [vmem:[%s238 + $0x68] sm:$0xff]
        %v264 = vld [vmem:[%s238 + $0x70] sm:$0xff]
        %v265 = vld [vmem:[%s238 + $0x78] sm:$0xff]
        %s266 = sshra.s32 %s249, 3
        %s267 = sand.u32 %s249, 7
        %s268 = smul.u32 %s266, 8
        %s269 = smul.addr %s268, 8
        %s270 = scalar_lea.vmem %s238, %s269
        %v271 = vld [vmem:[%s270] sm:$0xff]
        %v272 = vld [vmem:[%s270 + $0x8] sm:$0xff]
        %v273 = vld [vmem:[%s270 + $0x10] sm:$0xff]
        %v274 = vld [vmem:[%s270 + $0x18] sm:$0xff]
        %v275 = vld [vmem:[%s270 + $0x20] sm:$0xff]
        %v276 = vld [vmem:[%s270 + $0x28] sm:$0xff]
        %v277 = vld [vmem:[%s270 + $0x30] sm:$0xff]
        %v278 = vld [vmem:[%s270 + $0x38] sm:$0xff]
        %s279 = sld [smem:[#allocation3]]
        %v280 = vstv %s279
        %v281 = vmul.f32 %v271, %v280
        %v282 = vmul.f32 %v272, %v280
        %s283 = sld [smem:[#allocation3 + $0x1]]
        %v284 = vstv %s283
        %v285 = vmul.f32 %v273, %v284
        %v286 = vmul.f32 %v274, %v284
        %v287 = vadd.f32 %v281, %v285
        %v288 = vadd.f32 %v282, %v286
        %s289 = sld [smem:[#allocation3 + $0x2]]
        %v290 = vstv %s289
        %v291 = vmul.f32 %v275, %v290
        %v292 = vmul.f32 %v276, %v290
        %v293 = vadd.f32 %v287, %v291
        %v294 = vadd.f32 %v288, %v292
        %s295 = sld [smem:[#allocation3 + $0x3]]
        %v296 = vstv %s295
        %v297 = vmul.f32 %v277, %v296
        %v298 = vmul.f32 %v278, %v296
        %v299 = vadd.f32 %v293, %v297
        %v300 = vadd.f32 %v294, %v298
        %s301 = sld [smem:[#allocation5]]
        %v302 = vstv %s301
        %v303 = vadd.f32 %v299, %v302
        %v304 = vadd.f32 %v300, %v302
        %v305 = vpack.c.bf16 %v303, %v303
        %v306 = vpack.c.bf16 %v304, %v304
        %s307 = sld [smem:[#allocation3 + $0x4]]
        %v308 = vstv %s307
        %v309 = vmul.f32 %v271, %v308
        %v310 = vmul.f32 %v272, %v308
        %s311 = sld [smem:[#allocation3 + $0x5]]
        %v312 = vstv %s311
        %v313 = vmul.f32 %v273, %v312
        %v314 = vmul.f32 %v274, %v312
        %v315 = vadd.f32 %v309, %v313
        %v316 = vadd.f32 %v310, %v314
        %s317 = sld [smem:[#allocation3 + $0x6]]
        %v318 = vstv %s317
        %v319 = vmul.f32 %v275, %v318
        %v320 = vmul.f32 %v276, %v318
        %v321 = vadd.f32 %v315, %v319
        %v322 = vadd.f32 %v316, %v320
        %s323 = sld [smem:[#allocation3 + $0x7]]
        %v324 = vstv %s323
        %v325 = vmul.f32 %v277, %v324
        %v326 = vmul.f32 %v278, %v324
        %v327 = vadd.f32 %v321, %v325
        %v328 = vadd.f32 %v322, %v326
        %s329 = sld [smem:[#allocation5 + $0x1]]
        %v330 = vstv %s329
        %v331 = vadd.f32 %v327, %v330
        %v332 = vadd.f32 %v328, %v330
        %v333 = vpack.c.bf16 %v331, %v331
        %v334 = vpack.c.bf16 %v332, %v332
        %s335 = sld [smem:[#allocation3 + $0x8]]
        %v336 = vstv %s335
        %v337 = vmul.f32 %v271, %v336
        %v338 = vmul.f32 %v272, %v336
        %s339 = sld [smem:[#allocation3 + $0x9]]
        %v340 = vstv %s339
        %v341 = vmul.f32 %v273, %v340
        %v342 = vmul.f32 %v274, %v340
        %v343 = vadd.f32 %v337, %v341
        %v344 = vadd.f32 %v338, %v342
        %s345 = sld [smem:[#allocation3 + $0xa]]
        %v346 = vstv %s345
        %v347 = vmul.f32 %v275, %v346
        %v348 = vmul.f32 %v276, %v346
        %v349 = vadd.f32 %v343, %v347
        %v350 = vadd.f32 %v344, %v348
        %s351 = sld [smem:[#allocation3 + $0xb]]
        %v352 = vstv %s351
        %v353 = vmul.f32 %v277, %v352
        %v354 = vmul.f32 %v278, %v352
        %v355 = vadd.f32 %v349, %v353
        %v356 = vadd.f32 %v350, %v354
        %s357 = sld [smem:[#allocation5 + $0x2]]
        %v358 = vstv %s357
        %v359 = vadd.f32 %v355, %v358
        %v360 = vadd.f32 %v356, %v358
        %v361 = vpack.c.bf16 %v359, %v359
        %v362 = vpack.c.bf16 %v360, %v360
        %s363 = sld [smem:[#allocation3 + $0xc]]
        %v364 = vstv %s363
        %v365 = vmul.f32 %v271, %v364
        %v366 = vmul.f32 %v272, %v364
        %s367 = sld [smem:[#allocation3 + $0xd]]
        %v368 = vstv %s367
        %v369 = vmul.f32 %v273, %v368
        %v370 = vmul.f32 %v274, %v368
        %v371 = vadd.f32 %v365, %v369
        %v372 = vadd.f32 %v366, %v370
        %s373 = sld [smem:[#allocation3 + $0xe]]
        %v374 = vstv %s373
        %v375 = vmul.f32 %v275, %v374
        %v376 = vmul.f32 %v276, %v374
        %v377 = vadd.f32 %v371, %v375
        %v378 = vadd.f32 %v372, %v376
        %s379 = sld [smem:[#allocation3 + $0xf]]
        %v380 = vstv %s379
        %v381 = vmul.f32 %v277, %v380
        %v382 = vmul.f32 %v278, %v380
        %v383 = vadd.f32 %v377, %v381
        %v384 = vadd.f32 %v378, %v382
        %s385 = sld [smem:[#allocation5 + $0x3]]
        %v386 = vstv %s385
        %v387 = vadd.f32 %v383, %v386
        %v388 = vadd.f32 %v384, %v386
        %v389 = vpack.c.bf16 %v387, %v387
        %v390 = vpack.c.bf16 %v388, %v388
        %s391 = sld [smem:[#allocation3 + $0x10]]
        %v392 = vstv %s391
        %v393 = vmul.f32 %v250, %v392
        %v394 = vmul.f32 %v251, %v392
        %v395 = vmul.f32 %v258, %v392
        %v396 = vmul.f32 %v259, %v392
        %s397 = sld [smem:[#allocation3 + $0x11]]
        %v398 = vstv %s397
        %v399 = vmul.f32 %v252, %v398
        %v400 = vmul.f32 %v253, %v398
        %v401 = vmul.f32 %v260, %v398
        %v402 = vmul.f32 %v261, %v398
        %v403 = vadd.f32 %v393, %v399
        %v404 = vadd.f32 %v394, %v400
        %v405 = vadd.f32 %v395, %v401
        %v406 = vadd.f32 %v396, %v402
        %s407 = sld [smem:[#allocation3 + $0x12]]
        %v408 = vstv %s407
        %v409 = vmul.f32 %v254, %v408
        %v410 = vmul.f32 %v255, %v408
        %v411 = vmul.f32 %v262, %v408
        %v412 = vmul.f32 %v263, %v408
        %v413 = vadd.f32 %v403, %v409
        %v414 = vadd.f32 %v404, %v410
        %v415 = vadd.f32 %v405, %v411
        %v416 = vadd.f32 %v406, %v412
        %s417 = sld [smem:[#allocation3 + $0x13]]
        %v418 = vstv %s417
        %v419 = vmul.f32 %v256, %v418
        %v420 = vmul.f32 %v257, %v418
        %v421 = vmul.f32 %v264, %v418
        %v422 = vmul.f32 %v265, %v418
        %v423 = vadd.f32 %v413, %v419
        %v424 = vadd.f32 %v414, %v420
        %v425 = vadd.f32 %v415, %v421
        %v426 = vadd.f32 %v416, %v422
        %s427 = sld [smem:[#allocation5 + $0x4]]
        %v428 = vstv %s427
        %v429 = vadd.f32 %v423, %v428
        %v430 = vadd.f32 %v424, %v428
        %v431 = vadd.f32 %v425, %v428
        %v432 = vadd.f32 %v426, %v428
        %v433 = vpack.c.bf16 %v431, %v429
        %v434 = vpack.c.bf16 %v432, %v430
        %s435 = sld [smem:[#allocation3 + $0x14]]
        %v436 = vstv %s435
        %v437 = vmul.f32 %v250, %v436
        %v438 = vmul.f32 %v251, %v436
        %v439 = vmul.f32 %v258, %v436
        %v440 = vmul.f32 %v259, %v436
        %s441 = sld [smem:[#allocation3 + $0x15]]
        %v442 = vstv %s441
        %v443 = vmul.f32 %v252, %v442
        %v444 = vmul.f32 %v253, %v442
        %v445 = vmul.f32 %v260, %v442
        %v446 = vmul.f32 %v261, %v442
        %v447 = vadd.f32 %v437, %v443
        %v448 = vadd.f32 %v438, %v444
        %v449 = vadd.f32 %v439, %v445
        %v450 = vadd.f32 %v440, %v446
        %s451 = sld [smem:[#allocation3 + $0x16]]
        %v452 = vstv %s451
        %v453 = vmul.f32 %v254, %v452
        %v454 = vmul.f32 %v255, %v452
        %v455 = vmul.f32 %v262, %v452
        %v456 = vmul.f32 %v263, %v452
        %v457 = vadd.f32 %v447, %v453
        %v458 = vadd.f32 %v448, %v454
        %v459 = vadd.f32 %v449, %v455
        %v460 = vadd.f32 %v450, %v456
        %s461 = sld [smem:[#allocation3 + $0x17]]
        %v462 = vstv %s461
        %v463 = vmul.f32 %v256, %v462
        %v464 = vmul.f32 %v257, %v462
        %v465 = vmul.f32 %v264, %v462
        %v466 = vmul.f32 %v265, %v462
        %v467 = vadd.f32 %v457, %v463
        %v468 = vadd.f32 %v458, %v464
        %v469 = vadd.f32 %v459, %v465
        %v470 = vadd.f32 %v460, %v466
        %s471 = sld [smem:[#allocation5 + $0x5]]
        %v472 = vstv %s471
        %v473 = vadd.f32 %v467, %v472
        %v474 = vadd.f32 %v468, %v472
        %v475 = vadd.f32 %v469, %v472
        %v476 = vadd.f32 %v470, %v472
        %v477 = vpack.c.bf16 %v475, %v473
        %v478 = vpack.c.bf16 %v476, %v474
        %s479 = sld [smem:[#allocation3 + $0x18]]
        %v480 = vstv %s479
        %v481 = vmul.f32 %v250, %v480
        %v482 = vmul.f32 %v251, %v480
        %v483 = vmul.f32 %v258, %v480
        %v484 = vmul.f32 %v259, %v480
        %s485 = sld [smem:[#allocation3 + $0x19]]
        %v486 = vstv %s485
        %v487 = vmul.f32 %v252, %v486
        %v488 = vmul.f32 %v253, %v486
        %v489 = vmul.f32 %v260, %v486
        %v490 = vmul.f32 %v261, %v486
        %v491 = vadd.f32 %v481, %v487
        %v492 = vadd.f32 %v482, %v488
        %v493 = vadd.f32 %v483, %v489
        %v494 = vadd.f32 %v484, %v490
        %s495 = sld [smem:[#allocation3 + $0x1a]]
        %v496 = vstv %s495
        %v497 = vmul.f32 %v254, %v496
        %v498 = vmul.f32 %v255, %v496
        %v499 = vmul.f32 %v262, %v496
        %v500 = vmul.f32 %v263, %v496
        %v501 = vadd.f32 %v491, %v497
        %v502 = vadd.f32 %v492, %v498
        %v503 = vadd.f32 %v493, %v499
        %v504 = vadd.f32 %v494, %v500
        %s505 = sld [smem:[#allocation3 + $0x1b]]
        %v506 = vstv %s505
        %v507 = vmul.f32 %v256, %v506
        %v508 = vmul.f32 %v257, %v506
        %v509 = vmul.f32 %v264, %v506
        %v510 = vmul.f32 %v265, %v506
        %v511 = vadd.f32 %v501, %v507
        %v512 = vadd.f32 %v502, %v508
        %v513 = vadd.f32 %v503, %v509
        %v514 = vadd.f32 %v504, %v510
        %s515 = sld [smem:[#allocation5 + $0x6]]
        %v516 = vstv %s515
        %v517 = vadd.f32 %v511, %v516
        %v518 = vadd.f32 %v512, %v516
        %v519 = vadd.f32 %v513, %v516
        %v520 = vadd.f32 %v514, %v516
        %v521 = vpack.c.bf16 %v519, %v517
        %v522 = vpack.c.bf16 %v520, %v518
        %s523 = sld [smem:[#allocation3 + $0x1c]]
        %v524 = vstv %s523
        %v525 = vmul.f32 %v250, %v524
        %v526 = vmul.f32 %v251, %v524
        %v527 = vmul.f32 %v258, %v524
        %v528 = vmul.f32 %v259, %v524
        %s529 = sld [smem:[#allocation3 + $0x1d]]
        %v530 = vstv %s529
        %v531 = vmul.f32 %v252, %v530
        %v532 = vmul.f32 %v253, %v530
        %v533 = vmul.f32 %v260, %v530
        %v534 = vmul.f32 %v261, %v530
        %v535 = vadd.f32 %v525, %v531
        %v536 = vadd.f32 %v526, %v532
        %v537 = vadd.f32 %v527, %v533
        %v538 = vadd.f32 %v528, %v534
        %s539 = sld [smem:[#allocation3 + $0x1e]]
        %v540 = vstv %s539
        %v541 = vmul.f32 %v254, %v540
        %v542 = vmul.f32 %v255, %v540
        %v543 = vmul.f32 %v262, %v540
        %v544 = vmul.f32 %v263, %v540
        %v545 = vadd.f32 %v535, %v541
        %v546 = vadd.f32 %v536, %v542
        %v547 = vadd.f32 %v537, %v543
        %v548 = vadd.f32 %v538, %v544
        %s549 = sld [smem:[#allocation3 + $0x1f]]
        %v550 = vstv %s549
        %v551 = vmul.f32 %v256, %v550
        %v552 = vmul.f32 %v257, %v550
        %v553 = vmul.f32 %v264, %v550
        %v554 = vmul.f32 %v265, %v550
        %v555 = vadd.f32 %v545, %v551
        %v556 = vadd.f32 %v546, %v552
        %v557 = vadd.f32 %v547, %v553
        %v558 = vadd.f32 %v548, %v554
        %s559 = sld [smem:[#allocation5 + $0x7]]
        %v560 = vstv %s559
        %v561 = vadd.f32 %v555, %v560
        %v562 = vadd.f32 %v556, %v560
        %v563 = vadd.f32 %v557, %v560
        %v564 = vadd.f32 %v558, %v560
        %v565 = vpack.c.bf16 %v563, %v561
        %v566 = vpack.c.bf16 %v564, %v562
        %s567 = sld [smem:[#allocation3 + $0x20]]
        %v568 = vstv %s567
        %v569 = vmul.f32 %v250, %v568
        %v570 = vmul.f32 %v251, %v568
        %v571 = vmul.f32 %v258, %v568
        %v572 = vmul.f32 %v259, %v568
        %s573 = sld [smem:[#allocation3 + $0x21]]
        %v574 = vstv %s573
        %v575 = vmul.f32 %v252, %v574
        %v576 = vmul.f32 %v253, %v574
        %v577 = vmul.f32 %v260, %v574
        %v578 = vmul.f32 %v261, %v574
        %v579 = vadd.f32 %v569, %v575
        %v580 = vadd.f32 %v570, %v576
        %v581 = vadd.f32 %v571, %v577
        %v582 = vadd.f32 %v572, %v578
        %s583 = sld [smem:[#allocation3 + $0x22]]
        %v584 = vstv %s583
        %v585 = vmul.f32 %v254, %v584
        %v586 = vmul.f32 %v255, %v584
        %v587 = vmul.f32 %v262, %v584
        %v588 = vmul.f32 %v263, %v584
        %v589 = vadd.f32 %v579, %v585
        %v590 = vadd.f32 %v580, %v586
        %v591 = vadd.f32 %v581, %v587
        %v592 = vadd.f32 %v582, %v588
        %s593 = sld [smem:[#allocation3 + $0x23]]
        %v594 = vstv %s593
        %v595 = vmul.f32 %v256, %v594
        %v596 = vmul.f32 %v257, %v594
        %v597 = vmul.f32 %v264, %v594
        %v598 = vmul.f32 %v265, %v594
        %v599 = vadd.f32 %v589, %v595
        %v600 = vadd.f32 %v590, %v596
        %v601 = vadd.f32 %v591, %v597
        %v602 = vadd.f32 %v592, %v598
        %s603 = sld [smem:[#allocation5 + $0x8]]
        %v604 = vstv %s603
        %v605 = vadd.f32 %v599, %v604
        %v606 = vadd.f32 %v600, %v604
        %v607 = vadd.f32 %v601, %v604
        %v608 = vadd.f32 %v602, %v604
        %v609 = vpack.c.bf16 %v607, %v605
        %v610 = vpack.c.bf16 %v608, %v606
        %s611 = sld [smem:[#allocation3 + $0x24]]
        %v612 = vstv %s611
        %v613 = vmul.f32 %v250, %v612
        %v614 = vmul.f32 %v251, %v612
        %v615 = vmul.f32 %v258, %v612
        %v616 = vmul.f32 %v259, %v612
        %s617 = sld [smem:[#allocation3 + $0x25]]
        %v618 = vstv %s617
        %v619 = vmul.f32 %v252, %v618
        %v620 = vmul.f32 %v253, %v618
        %v621 = vmul.f32 %v260, %v618
        %v622 = vmul.f32 %v261, %v618
        %v623 = vadd.f32 %v613, %v619
        %v624 = vadd.f32 %v614, %v620
        %v625 = vadd.f32 %v615, %v621
        %v626 = vadd.f32 %v616, %v622
        %s627 = sld [smem:[#allocation3 + $0x26]]
        %v628 = vstv %s627
        %v629 = vmul.f32 %v254, %v628
        %v630 = vmul.f32 %v255, %v628
        %v631 = vmul.f32 %v262, %v628
        %v632 = vmul.f32 %v263, %v628
        %v633 = vadd.f32 %v623, %v629
        %v634 = vadd.f32 %v624, %v630
        %v635 = vadd.f32 %v625, %v631
        %v636 = vadd.f32 %v626, %v632
        %s637 = sld [smem:[#allocation3 + $0x27]]
        %v638 = vstv %s637
        %v639 = vmul.f32 %v256, %v638
        %v640 = vmul.f32 %v257, %v638
        %v641 = vmul.f32 %v264, %v638
        %v642 = vmul.f32 %v265, %v638
        %v643 = vadd.f32 %v633, %v639
        %v644 = vadd.f32 %v634, %v640
        %v645 = vadd.f32 %v635, %v641
        %v646 = vadd.f32 %v636, %v642
        %s647 = sld [smem:[#allocation5 + $0x9]]
        %v648 = vstv %s647
        %v649 = vadd.f32 %v643, %v648
        %v650 = vadd.f32 %v644, %v648
        %v651 = vadd.f32 %v645, %v648
        %v652 = vadd.f32 %v646, %v648
        %v653 = vpack.c.bf16 %v651, %v649
        %v654 = vpack.c.bf16 %v652, %v650
        %s655 = sld [smem:[#allocation3 + $0x28]]
        %v656 = vstv %s655
        %v657 = vmul.f32 %v250, %v656
        %v658 = vmul.f32 %v251, %v656
        %v659 = vmul.f32 %v258, %v656
        %v660 = vmul.f32 %v259, %v656
        %s661 = sld [smem:[#allocation3 + $0x29]]
        %v662 = vstv %s661
        %v663 = vmul.f32 %v252, %v662
        %v664 = vmul.f32 %v253, %v662
        %v665 = vmul.f32 %v260, %v662
        %v666 = vmul.f32 %v261, %v662
        %v667 = vadd.f32 %v657, %v663
        %v668 = vadd.f32 %v658, %v664
        %v669 = vadd.f32 %v659, %v665
        %v670 = vadd.f32 %v660, %v666
        %s671 = sld [smem:[#allocation3 + $0x2a]]
        %v672 = vstv %s671
        %v673 = vmul.f32 %v254, %v672
        %v674 = vmul.f32 %v255, %v672
        %v675 = vmul.f32 %v262, %v672
        %v676 = vmul.f32 %v263, %v672
        %v677 = vadd.f32 %v667, %v673
        %v678 = vadd.f32 %v668, %v674
        %v679 = vadd.f32 %v669, %v675
        %v680 = vadd.f32 %v670, %v676
        %s681 = sld [smem:[#allocation3 + $0x2b]]
        %v682 = vstv %s681
        %v683 = vmul.f32 %v256, %v682
        %v684 = vmul.f32 %v257, %v682
        %v685 = vmul.f32 %v264, %v682
        %v686 = vmul.f32 %v265, %v682
        %v687 = vadd.f32 %v677, %v683
        %v688 = vadd.f32 %v678, %v684
        %v689 = vadd.f32 %v679, %v685
        %v690 = vadd.f32 %v680, %v686
        %s691 = sld [smem:[#allocation5 + $0xa]]
        %v692 = vstv %s691
        %v693 = vadd.f32 %v687, %v692
        %v694 = vadd.f32 %v688, %v692
        %v695 = vadd.f32 %v689, %v692
        %v696 = vadd.f32 %v690, %v692
        %v697 = vpack.c.bf16 %v695, %v693
        %v698 = vpack.c.bf16 %v696, %v694
        %s699 = sld [smem:[#allocation3 + $0x2c]]
        %v700 = vstv %s699
        %v701 = vmul.f32 %v250, %v700
        %v702 = vmul.f32 %v251, %v700
        %v703 = vmul.f32 %v258, %v700
        %v704 = vmul.f32 %v259, %v700
        %s705 = sld [smem:[#allocation3 + $0x2d]]
        %v706 = vstv %s705
        %v707 = vmul.f32 %v252, %v706
        %v708 = vmul.f32 %v253, %v706
        %v709 = vmul.f32 %v260, %v706
        %v710 = vmul.f32 %v261, %v706
        %v711 = vadd.f32 %v701, %v707
        %v712 = vadd.f32 %v702, %v708
        %v713 = vadd.f32 %v703, %v709
        %v714 = vadd.f32 %v704, %v710
        %s715 = sld [smem:[#allocation3 + $0x2e]]
        %v716 = vstv %s715
        %v717 = vmul.f32 %v254, %v716
        %v718 = vmul.f32 %v255, %v716
        %v719 = vmul.f32 %v262, %v716
        %v720 = vmul.f32 %v263, %v716
        %v721 = vadd.f32 %v711, %v717
        %v722 = vadd.f32 %v712, %v718
        %v723 = vadd.f32 %v713, %v719
        %v724 = vadd.f32 %v714, %v720
        %s725 = sld [smem:[#allocation3 + $0x2f]]
        %v726 = vstv %s725
        %v727 = vmul.f32 %v256, %v726
        %v728 = vmul.f32 %v257, %v726
        %v729 = vmul.f32 %v264, %v726
        %v730 = vmul.f32 %v265, %v726
        %v731 = vadd.f32 %v721, %v727
        %v732 = vadd.f32 %v722, %v728
        %v733 = vadd.f32 %v723, %v729
        %v734 = vadd.f32 %v724, %v730
        %s735 = sld [smem:[#allocation5 + $0xb]]
        %v736 = vstv %s735
        %v737 = vadd.f32 %v731, %v736
        %v738 = vadd.f32 %v732, %v736
        %v739 = vadd.f32 %v733, %v736
        %v740 = vadd.f32 %v734, %v736
        %v741 = vpack.c.bf16 %v739, %v737
        %v742 = vpack.c.bf16 %v740, %v738
        %743 = vmatprep.subr.bf16.mxu0 0
        %744 = vmatpush1.bf16.xpose.msra.mxu0 0
        %745 = vmatprep.subr.bf16.mxu0 0
        %746 = vmatpush1.bf16.xpose.msra.mxu0 0
        %747 = vmatprep.subr.bf16.mxu0 0
        %748 = vmatpush1.bf16.xpose.msra.mxu0 0
        %749 = vmatprep.subr.bf16.mxu0 0
        %750 = vmatpush1.bf16.xpose.msra.mxu0 0
        %751 = vmatprep.subr.bf16.mxu0 0
        %752 = vmatpush1.bf16.xpose.msra.mxu0 0
        %753 = vmatprep.subr.bf16.mxu0 0
        %754 = vmatpush1.bf16.xpose.msra.mxu0 0
        %755 = vmatprep.subr.bf16.mxu0 0
        %756 = vmatpush1.bf16.xpose.msra.mxu0 0
        %757 = vmatprep.subr.bf16.mxu0 %v434
        %758 = vmatpush1.bf16.xpose.msra.mxu0 %v433
        %759 = vmatprep.subr.bf16.mxu0 0
        %760 = vmatpush2.bf16.xpose.msra.mxu0 0
        %761 = vmatprep.subr.bf16.mxu0 0
        %762 = vmatpush2.bf16.xpose.msra.mxu0 0
        %763 = vmatprep.subr.bf16.mxu0 0
        %764 = vmatpush2.bf16.xpose.msra.mxu0 0
        %765 = vmatprep.subr.bf16.mxu0 0
        %766 = vmatpush2.bf16.xpose.msra.mxu0 0
        %767 = vmatprep.subr.bf16.mxu0 0
        %768 = vmatpush2.bf16.xpose.msra.mxu0 0
        %769 = vmatprep.subr.bf16.mxu0 0
        %770 = vmatpush2.bf16.xpose.msra.mxu0 0
        %771 = vmatprep.subr.bf16.mxu0 0
        %772 = vmatpush2.bf16.xpose.msra.mxu0 0
        %773 = vmatprep.subr.bf16.mxu0 0
        %774 = vmatpush2.bf16.xpose.msra.mxu0 0
        %775 = vmatprep.mubr.bf16.mxu0 %v306
        %776 = vmatmul.mubr.bf16.gmra.mxu0 %v305
        %v777 = vpop.f32.mrf.mxu0
        %v778 = vadd.f32 0.0, %v777
        %v779 = vpop.f32.mrf.mxu0
        %v780 = vpop.f32.mrf.mxu0
        %v781 = vpop.f32.mrf.mxu0
        %782 = vdwg.mxu0
        %783 = vmatprep.subr.bf16.mxu0 0
        %784 = vmatpush1.bf16.xpose.msra.mxu0 0
        %785 = vmatprep.subr.bf16.mxu0 0
        %786 = vmatpush1.bf16.xpose.msra.mxu0 0
        %787 = vmatprep.subr.bf16.mxu0 0
        %788 = vmatpush1.bf16.xpose.msra.mxu0 0
        %789 = vmatprep.subr.bf16.mxu0 0
        %790 = vmatpush1.bf16.xpose.msra.mxu0 0
        %791 = vmatprep.subr.bf16.mxu0 0
        %792 = vmatpush1.bf16.xpose.msra.mxu0 0
        %793 = vmatprep.subr.bf16.mxu0 0
        %794 = vmatpush1.bf16.xpose.msra.mxu0 0
        %795 = vmatprep.subr.bf16.mxu0 0
        %796 = vmatpush1.bf16.xpose.msra.mxu0 0
        %797 = vmatprep.subr.bf16.mxu0 %v478
        %798 = vmatpush1.bf16.xpose.msra.mxu0 %v477
        %799 = vmatprep.subr.bf16.mxu0 0
        %800 = vmatpush2.bf16.xpose.msra.mxu0 0
        %801 = vmatprep.subr.bf16.mxu0 0
        %802 = vmatpush2.bf16.xpose.msra.mxu0 0
        %803 = vmatprep.subr.bf16.mxu0 0
        %804 = vmatpush2.bf16.xpose.msra.mxu0 0
        %805 = vmatprep.subr.bf16.mxu0 0
        %806 = vmatpush2.bf16.xpose.msra.mxu0 0
        %807 = vmatprep.subr.bf16.mxu0 0
        %808 = vmatpush2.bf16.xpose.msra.mxu0 0
        %809 = vmatprep.subr.bf16.mxu0 0
        %810 = vmatpush2.bf16.xpose.msra.mxu0 0
        %811 = vmatprep.subr.bf16.mxu0 0
        %812 = vmatpush2.bf16.xpose.msra.mxu0 0
        %813 = vmatprep.subr.bf16.mxu0 0
        %814 = vmatpush2.bf16.xpose.msra.mxu0 0
        %815 = vmatprep.mubr.bf16.mxu0 %v334
        %816 = vmatmul.mubr.bf16.gmra.mxu0 %v333
        %v817 = vpop.f32.mrf.mxu0
        %v818 = vadd.f32 %v778, %v817
        %v819 = vpop.f32.mrf.mxu0
        %v820 = vpop.f32.mrf.mxu0
        %v821 = vpop.f32.mrf.mxu0
        %822 = vdwg.mxu0
        %823 = vmatprep.subr.bf16.mxu0 0
        %824 = vmatpush1.bf16.xpose.msra.mxu0 0
        %825 = vmatprep.subr.bf16.mxu0 0
        %826 = vmatpush1.bf16.xpose.msra.mxu0 0
        %827 = vmatprep.subr.bf16.mxu0 0
        %828 = vmatpush1.bf16.xpose.msra.mxu0 0
        %829 = vmatprep.subr.bf16.mxu0 0
        %830 = vmatpush1.bf16.xpose.msra.mxu0 0
        %831 = vmatprep.subr.bf16.mxu0 0
        %832 = vmatpush1.bf16.xpose.msra.mxu0 0
        %833 = vmatprep.subr.bf16.mxu0 0
        %834 = vmatpush1.bf16.xpose.msra.mxu0 0
        %835 = vmatprep.subr.bf16.mxu0 0
        %836 = vmatpush1.bf16.xpose.msra.mxu0 0
        %837 = vmatprep.subr.bf16.mxu0 %v522
        %838 = vmatpush1.bf16.xpose.msra.mxu0 %v521
        %839 = vmatprep.subr.bf16.mxu0 0
        %840 = vmatpush2.bf16.xpose.msra.mxu0 0
        %841 = vmatprep.subr.bf16.mxu0 0
        %842 = vmatpush2.bf16.xpose.msra.mxu0 0
        %843 = vmatprep.subr.bf16.mxu0 0
        %844 = vmatpush2.bf16.xpose.msra.mxu0 0
        %845 = vmatprep.subr.bf16.mxu0 0
        %846 = vmatpush2.bf16.xpose.msra.mxu0 0
        %847 = vmatprep.subr.bf16.mxu0 0
        %848 = vmatpush2.bf16.xpose.msra.mxu0 0
        %849 = vmatprep.subr.bf16.mxu0 0
        %850 = vmatpush2.bf16.xpose.msra.mxu0 0
        %851 = vmatprep.subr.bf16.mxu0 0
        %852 = vmatpush2.bf16.xpose.msra.mxu0 0
        %853 = vmatprep.subr.bf16.mxu0 0
        %854 = vmatpush2.bf16.xpose.msra.mxu0 0
        %855 = vmatprep.mubr.bf16.mxu0 %v362
        %856 = vmatmul.mubr.bf16.gmra.mxu0 %v361
        %v857 = vpop.f32.mrf.mxu0
        %v858 = vadd.f32 %v818, %v857
        %v859 = vpop.f32.mrf.mxu0
        %v860 = vpop.f32.mrf.mxu0
        %v861 = vpop.f32.mrf.mxu0
        %862 = vdwg.mxu0
        %863 = vmatprep.subr.bf16.mxu0 0
        %864 = vmatpush1.bf16.xpose.msra.mxu0 0
        %865 = vmatprep.subr.bf16.mxu0 0
        %866 = vmatpush1.bf16.xpose.msra.mxu0 0
        %867 = vmatprep.subr.bf16.mxu0 0
        %868 = vmatpush1.bf16.xpose.msra.mxu0 0
        %869 = vmatprep.subr.bf16.mxu0 0
        %870 = vmatpush1.bf16.xpose.msra.mxu0 0
        %871 = vmatprep.subr.bf16.mxu0 0
        %872 = vmatpush1.bf16.xpose.msra.mxu0 0
        %873 = vmatprep.subr.bf16.mxu0 0
        %874 = vmatpush1.bf16.xpose.msra.mxu0 0
        %875 = vmatprep.subr.bf16.mxu0 0
        %876 = vmatpush1.bf16.xpose.msra.mxu0 0
        %877 = vmatprep.subr.bf16.mxu0 %v566
        %878 = vmatpush1.bf16.xpose.msra.mxu0 %v565
        %879 = vmatprep.subr.bf16.mxu0 0
        %880 = vmatpush2.bf16.xpose.msra.mxu0 0
        %881 = vmatprep.subr.bf16.mxu0 0
        %882 = vmatpush2.bf16.xpose.msra.mxu0 0
        %883 = vmatprep.subr.bf16.mxu0 0
        %884 = vmatpush2.bf16.xpose.msra.mxu0 0
        %885 = vmatprep.subr.bf16.mxu0 0
        %886 = vmatpush2.bf16.xpose.msra.mxu0 0
        %887 = vmatprep.subr.bf16.mxu0 0
        %888 = vmatpush2.bf16.xpose.msra.mxu0 0
        %889 = vmatprep.subr.bf16.mxu0 0
        %890 = vmatpush2.bf16.xpose.msra.mxu0 0
        %891 = vmatprep.subr.bf16.mxu0 0
        %892 = vmatpush2.bf16.xpose.msra.mxu0 0
        %893 = vmatprep.subr.bf16.mxu0 0
        %894 = vmatpush2.bf16.xpose.msra.mxu0 0
        %895 = vmatprep.mubr.bf16.mxu0 %v390
        %896 = vmatmul.mubr.bf16.gmra.mxu0 %v389
        %v897 = vpop.f32.mrf.mxu0
        %v898 = vadd.f32 %v858, %v897
        %v899 = vpop.f32.mrf.mxu0
        %v900 = vpop.f32.mrf.mxu0
        %v901 = vpop.f32.mrf.mxu0
        %902 = vdwg.mxu0
        %vm903 = vcmask 130048
        %v904 = vsel %vm903, %v898, -inf
        %905 = vmax.xlane.f32.xlu0 %v904
        %v906 = vpop.xlane.xlu0 %905
        %v907 = vsub.f32 %v898, %v906
        %v908 = vmul.f32 %v907, 1.442695
        %v909 = vpow.pop %v908
        %v910 = vsel %vm903, %v909, 0.0
        %911 = vadd.xlane.f32.xlu0 %v910
        %v912 = vpop.xlane.xlu0 %911
        %v913 = vrcp.pop %v912
        %v914 = vmul.f32 %v909, %v913
        %v915 = vpack.c.bf16 %v914, %v914
        %v917 = vsel %vm903, %v915, 0
        %919 = vmatprep.subr.bf16.mxu0 0
        %920 = vmatpush1.bf16.msra.mxu0 0
        %921 = vmatprep.subr.bf16.mxu0 0
        %922 = vmatpush1.bf16.msra.mxu0 0
        %923 = vmatprep.subr.bf16.mxu0 0
        %924 = vmatpush1.bf16.msra.mxu0 0
        %925 = vmatprep.subr.bf16.mxu0 0
        %926 = vmatpush1.bf16.msra.mxu0 0
        %927 = vmatprep.subr.bf16.mxu0 0
        %928 = vmatpush1.bf16.msra.mxu0 0
        %929 = vmatprep.subr.bf16.mxu0 0
        %930 = vmatpush1.bf16.msra.mxu0 0
        %931 = vmatprep.subr.bf16.mxu0 0
        %932 = vmatpush1.bf16.msra.mxu0 0
        %933 = vmatprep.subr.bf16.mxu0 %v610
        %934 = vmatpush1.bf16.msra.mxu0 %v609
        %935 = vmatprep.subr.bf16.mxu0 0
        %936 = vmatpush2.bf16.msra.mxu0 0
        %937 = vmatprep.subr.bf16.mxu0 0
        %938 = vmatpush2.bf16.msra.mxu0 0
        %939 = vmatprep.subr.bf16.mxu0 0
        %940 = vmatpush2.bf16.msra.mxu0 0
        %941 = vmatprep.subr.bf16.mxu0 0
        %942 = vmatpush2.bf16.msra.mxu0 0
        %943 = vmatprep.subr.bf16.mxu0 0
        %944 = vmatpush2.bf16.msra.mxu0 0
        %945 = vmatprep.subr.bf16.mxu0 0
        %946 = vmatpush2.bf16.msra.mxu0 0
        %947 = vmatprep.subr.bf16.mxu0 0
        %948 = vmatpush2.bf16.msra.mxu0 0
        %949 = vmatprep.subr.bf16.mxu0 0
        %950 = vmatpush2.bf16.msra.mxu0 0
        %951 = vmatprep.mubr.bf16.mxu0 0
        %952 = vmatmul.mubr.bf16.gmra.mxu0 %v917
        %v953 = vpop.f32.mrf.mxu0
        %v954 = vadd.f32 0.0, %v953
        %v955 = vpop.f32.mrf.mxu0
        %v956 = vadd.f32 0.0, %v955
        %v957 = vpop.f32.mrf.mxu0
        %v958 = vpop.f32.mrf.mxu0
        %959 = vdwg.mxu0
        %960 = vmatprep.subr.bf16.mxu0 0
        %961 = vmatpush1.bf16.msra.mxu0 0
        %962 = vmatprep.subr.bf16.mxu0 0
        %963 = vmatpush1.bf16.msra.mxu0 0
        %964 = vmatprep.subr.bf16.mxu0 0
        %965 = vmatpush1.bf16.msra.mxu0 0
        %966 = vmatprep.subr.bf16.mxu0 0
        %967 = vmatpush1.bf16.msra.mxu0 0
        %968 = vmatprep.subr.bf16.mxu0 0
        %969 = vmatpush1.bf16.msra.mxu0 0
        %970 = vmatprep.subr.bf16.mxu0 0
        %971 = vmatpush1.bf16.msra.mxu0 0
        %972 = vmatprep.subr.bf16.mxu0 0
        %973 = vmatpush1.bf16.msra.mxu0 0
        %974 = vmatprep.subr.bf16.mxu0 %v654
        %975 = vmatpush1.bf16.msra.mxu0 %v653
        %976 = vmatprep.subr.bf16.mxu0 0
        %977 = vmatpush2.bf16.msra.mxu0 0
        %978 = vmatprep.subr.bf16.mxu0 0
        %979 = vmatpush2.bf16.msra.mxu0 0
        %980 = vmatprep.subr.bf16.mxu0 0
        %981 = vmatpush2.bf16.msra.mxu0 0
        %982 = vmatprep.subr.bf16.mxu0 0
        %983 = vmatpush2.bf16.msra.mxu0 0
        %984 = vmatprep.subr.bf16.mxu0 0
        %985 = vmatpush2.bf16.msra.mxu0 0
        %986 = vmatprep.subr.bf16.mxu0 0
        %987 = vmatpush2.bf16.msra.mxu0 0
        %988 = vmatprep.subr.bf16.mxu0 0
        %989 = vmatpush2.bf16.msra.mxu0 0
        %990 = vmatprep.subr.bf16.mxu0 0
        %991 = vmatpush2.bf16.msra.mxu0 0
        %992 = vmatprep.mubr.bf16.mxu0 0
        %993 = vmatmul.mubr.bf16.gmra.mxu0 %v917
        %v994 = vpop.f32.mrf.mxu0
        %v995 = vadd.f32 0.0, %v994
        %v996 = vpop.f32.mrf.mxu0
        %v997 = vadd.f32 0.0, %v996
        %v998 = vpop.f32.mrf.mxu0
        %v999 = vpop.f32.mrf.mxu0
        %1000 = vdwg.mxu0
        %1001 = vmatprep.subr.bf16.mxu0 0
        %1002 = vmatpush1.bf16.msra.mxu0 0
        %1003 = vmatprep.subr.bf16.mxu0 0
        %1004 = vmatpush1.bf16.msra.mxu0 0
        %1005 = vmatprep.subr.bf16.mxu0 0
        %1006 = vmatpush1.bf16.msra.mxu0 0
        %1007 = vmatprep.subr.bf16.mxu0 0
        %1008 = vmatpush1.bf16.msra.mxu0 0
        %1009 = vmatprep.subr.bf16.mxu0 0
        %1010 = vmatpush1.bf16.msra.mxu0 0
        %1011 = vmatprep.subr.bf16.mxu0 0
        %1012 = vmatpush1.bf16.msra.mxu0 0
        %1013 = vmatprep.subr.bf16.mxu0 0
        %1014 = vmatpush1.bf16.msra.mxu0 0
        %1015 = vmatprep.subr.bf16.mxu0 %v698
        %1016 = vmatpush1.bf16.msra.mxu0 %v697
        %1017 = vmatprep.subr.bf16.mxu0 0
        %1018 = vmatpush2.bf16.msra.mxu0 0
        %1019 = vmatprep.subr.bf16.mxu0 0
        %1020 = vmatpush2.bf16.msra.mxu0 0
        %1021 = vmatprep.subr.bf16.mxu0 0
        %1022 = vmatpush2.bf16.msra.mxu0 0
        %1023 = vmatprep.subr.bf16.mxu0 0
        %1024 = vmatpush2.bf16.msra.mxu0 0
        %1025 = vmatprep.subr.bf16.mxu0 0
        %1026 = vmatpush2.bf16.msra.mxu0 0
        %1027 = vmatprep.subr.bf16.mxu0 0
        %1028 = vmatpush2.bf16.msra.mxu0 0
        %1029 = vmatprep.subr.bf16.mxu0 0
        %1030 = vmatpush2.bf16.msra.mxu0 0
        %1031 = vmatprep.subr.bf16.mxu0 0
        %1032 = vmatpush2.bf16.msra.mxu0 0
        %1033 = vmatprep.mubr.bf16.mxu0 0
        %1034 = vmatmul.mubr.bf16.gmra.mxu0 %v917
        %v1035 = vpop.f32.mrf.mxu0
        %v1036 = vadd.f32 0.0, %v1035
        %v1037 = vpop.f32.mrf.mxu0
        %v1038 = vadd.f32 0.0, %v1037
        %v1039 = vpop.f32.mrf.mxu0
        %v1040 = vpop.f32.mrf.mxu0
        %1041 = vdwg.mxu0
        %1042 = vmatprep.subr.bf16.mxu0 0
        %1043 = vmatpush1.bf16.msra.mxu0 0
        %1044 = vmatprep.subr.bf16.mxu0 0
        %1045 = vmatpush1.bf16.msra.mxu0 0
        %1046 = vmatprep.subr.bf16.mxu0 0
        %1047 = vmatpush1.bf16.msra.mxu0 0
        %1048 = vmatprep.subr.bf16.mxu0 0
        %1049 = vmatpush1.bf16.msra.mxu0 0
        %1050 = vmatprep.subr.bf16.mxu0 0
        %1051 = vmatpush1.bf16.msra.mxu0 0
        %1052 = vmatprep.subr.bf16.mxu0 0
        %1053 = vmatpush1.bf16.msra.mxu0 0
        %1054 = vmatprep.subr.bf16.mxu0 0
        %1055 = vmatpush1.bf16.msra.mxu0 0
        %1056 = vmatprep.subr.bf16.mxu0 %v742
        %1057 = vmatpush1.bf16.msra.mxu0 %v741
        %1058 = vmatprep.subr.bf16.mxu0 0
        %1059 = vmatpush2.bf16.msra.mxu0 0
        %1060 = vmatprep.subr.bf16.mxu0 0
        %1061 = vmatpush2.bf16.msra.mxu0 0
        %1062 = vmatprep.subr.bf16.mxu0 0
        %1063 = vmatpush2.bf16.msra.mxu0 0
        %1064 = vmatprep.subr.bf16.mxu0 0
        %1065 = vmatpush2.bf16.msra.mxu0 0
        %1066 = vmatprep.subr.bf16.mxu0 0
        %1067 = vmatpush2.bf16.msra.mxu0 0
        %1068 = vmatprep.subr.bf16.mxu0 0
        %1069 = vmatpush2.bf16.msra.mxu0 0
        %1070 = vmatprep.subr.bf16.mxu0 0
        %1071 = vmatpush2.bf16.msra.mxu0 0
        %1072 = vmatprep.subr.bf16.mxu0 0
        %1073 = vmatpush2.bf16.msra.mxu0 0
        %1074 = vmatprep.mubr.bf16.mxu0 0
        %1075 = vmatmul.mubr.bf16.gmra.mxu0 %v917
        %v1076 = vpop.f32.mrf.mxu0
        %v1077 = vadd.f32 0.0, %v1076
        %v1078 = vpop.f32.mrf.mxu0
        %v1079 = vadd.f32 0.0, %v1078
        %v1080 = vpop.f32.mrf.mxu0
        %v1081 = vpop.f32.mrf.mxu0
        %1082 = vdwg.mxu0
        %s1083 = sld [smem:[#allocation2]]
        %v1084 = vstv %s1083
        %v1085 = vmul.f32 %v1084, %v954
        %v1086 = vmul.f32 %v1084, %v956
        %v1087 = vmul.f32 %v1084, %v995
        %v1088 = vmul.f32 %v1084, %v997
        %v1089 = vmul.f32 %v1084, %v1036
        %v1090 = vmul.f32 %v1084, %v1038
        %v1091 = vmul.f32 %v1084, %v1077
        %v1092 = vmul.f32 %v1084, %v1079
        %v1093 = vadd.f32 %v271, %v1085
        %v1094 = vadd.f32 %v272, %v1086
        %v1095 = vadd.f32 %v273, %v1087
        %v1096 = vadd.f32 %v274, %v1088
        %v1097 = vadd.f32 %v275, %v1089
        %v1098 = vadd.f32 %v276, %v1090
        %v1099 = vadd.f32 %v277, %v1091
        %v1100 = vadd.f32 %v278, %v1092
        %1101 = vst [vmem:[%s247] sm:$0xff] %v1093
        %1102 = vst [vmem:[%s247 + $0x8] sm:$0xff] %v1094
        %1103 = vst [vmem:[%s247 + $0x10] sm:$0xff] %v1095
        %1104 = vst [vmem:[%s247 + $0x18] sm:$0xff] %v1096
        %1105 = vst [vmem:[%s247 + $0x20] sm:$0xff] %v1097
        %1106 = vst [vmem:[%s247 + $0x28] sm:$0xff] %v1098
        %1107 = vst [vmem:[%s247 + $0x30] sm:$0xff] %v1099
        %1108 = vst [vmem:[%s247 + $0x38] sm:$0xff] %v1100
        %p1109 = scmp.lt.s32.totalorder %s22, 1
        %s1110 = scalar_select %p1109, %s22, 1
        %p1111 = scmp.lt.s32.totalorder %s23, 1
        %s1112 = scalar_select %p1111, %s23, 1
        %s1113 = smul.addr %s1112, 8
        %s1114 = smul.addr %s1110, 16
        %s1115 = sadd.s32 %s1113, %s1114
        %s1116 = smul.addr %s1115, 8
        %s1117 = scalar_lea.vmem %s4, %s1116
        // Predicated region
        $region45: #{rsa_block_forward.3} parent=35 // pred_check
          %p1118 = pneg %p139
        $region46: #{rsa_block_forward.3} parent=35 // pred_check_branch
          %1120 = sbr.rel (%p1118) target = $region48
        $region47: #{rsa_block_forward.3} parent=35 // pred_region
          _
        $region48: #{rsa_block_forward.3} parent=35 // pred_fallthru
          _
      $region36: #{rsa_block_forward.3} parent=5 // pred_fallthru
        _
      %p1121 = scmp.le.s32.totalorder 2, %s13
      // Predicated region
      $region49: #{rsa_block_forward.3} parent=5 // pred_check
        %p1122 = pneg %p1121
      $region50: #{rsa_block_forward.3} parent=5 // pred_check_branch
        %1124 = sbr.rel (%p1122) target = $region52
      $region51: #{rsa_block_forward.3} parent=5 // pred_region
        %s1125 = ssub.s32 %s13, 2
        // Predicated region
        $region53: #{rsa_block_forward.3} parent=51 // pred_check
          %p1126 = pneg %p145
        $region54: #{rsa_block_forward.3} parent=51 // pred_check_branch
          %1128 = sbr.rel (%p1126) target = $region56
        $region55: #{rsa_block_forward.3} parent=51 // pred_region
          %p1129 = scmp.lt.s32.totalorder %s24, 1
          %s1130 = scalar_select %p1129, %s24, 1
          %p1131 = scmp.lt.s32.totalorder %s25, 1
          %s1132 = scalar_select %p1131, %s25, 1
          %s1133 = smul.addr %s1132, 8
          %s1134 = smul.addr %s1130, 16
          %s1135 = sadd.s32 %s1133, %s1134
          %s1136 = smul.addr %s1135, 8
          %s1137 = scalar_lea.vmem %s4, %s1136
        $region56: #{rsa_block_forward.3} parent=51 // pred_fallthru
          _
      $region52: #{rsa_block_forward.3} parent=5 // pred_fallthru
        _
    $region6: #{rsa_block_forward.3} parent=1 // loop_footer
      %s17 = sadd.s32 1, %s13
    $region7: #{rsa_block_forward.3} parent=1 // loop_footer_branch
      %12 = sbr.rel target = $region3
    $region8: #{rsa_block_forward.3} parent=1 // loop_exit
      _
    %1138 = vsyncpa [#allocation4], 1
    %s1139 = scalar_lea.sflag [#allocation4], 1
    %1140 = vsyncpa %s1139, 1
    %1141 = vsyncpa [#allocation6], 1

</llo_original>
